<compile_context>
chip_gen: v5e
topology: v5e:2x2
jax: 0.10.0
libtpu: 0.0.40
codegen_flags: <defaults>
</compile_context>

<pallas_src>
import math

import jax
import jax.numpy as jnp
from jax import lax
from jax.experimental import pallas as pl
from jax.experimental.pallas import tpu as pltpu

# ---------------------------------------------------------------------------
# Model configuration (synthetic, matches the previous version).
# ---------------------------------------------------------------------------
H_IMG = 8
W_IMG = 8
HW = H_IMG * W_IMG            # 64 spatial positions per image
BATCH = 2
C_IN = 1                      # state_channels
C_IN_PAD = 8                  # pad conv1 input channels to a full sublane group
C1, C2, C3 = 16, 32, 32
ACTIONS = 4                   # action_nums
HEAD_OUT = ACTIONS + 1        # [advantage | value]
HEAD_PAD = 8                  # pad merged head rows to a multiple of 8
FLAT = C3 * HW                # 2048 = fc1 / val in_features
NEG_SLOPE = 0.01              # F.leaky_relu default negative slope


# ---------------------------------------------------------------------------
# Fused Pallas kernel
# ---------------------------------------------------------------------------
def _fused_forward_kernel(mask_ref, x_ref, w1_ref, b1_ref, w2_ref, b2_ref,
                          w3_ref, b3_ref, wh_ref, bh_ref, o_ref, flat_ref):
    m_total = x_ref.shape[1]          # B * H * W  (lane dimension, 128 here)
    batch, n_act = o_ref.shape

    def leaky_relu(v):
        return jnp.where(v >= 0.0, v, NEG_SLOPE * v)

    def conv3x3(act, w_ref, b_ref):
        """3x3 / stride-1 / pad-1 conv in transposed, lane-dense (C, B*H*W) layout.

        Weight is packed lane-dense as (Cout, 9*Cin); the 9 shifted+masked
        activation views are stacked along sublanes into (9*Cin, M) so the
        whole conv is a single MXU matmul.
        """
        c_out = w_ref.shape[0]
        # Aligned self-concat -> any circular lane shift is a static slice.
        act2 = jnp.concatenate([act, act], axis=1)            # (Cin, 2*M)
        taps = []
        for idx in range(9):
            dy, dx = idx // 3 - 1, idx % 3 - 1
            off = dy * W_IMG + dx                              # flat lane shift of tap
            s = off % m_total
            shifted = act if s == 0 else act2[:, s:s + m_total]
            if (dy, dx) != (0, 0):
                # Zero out taps that fall outside the image (the conv's zero
                # pad) or that crossed an image/batch boundary after the shift.
                shifted = shifted * mask_ref[idx:idx + 1, :]
            taps.append(shifted)
        stacked = jnp.concatenate(taps, axis=0)                # (9*Cin, M)
        acc = jnp.dot(w_ref[...], stacked,
                      preferred_element_type=jnp.float32)      # (Cout, M)
        return leaky_relu(acc + b_ref[...])                    # bias: (Cout, 1)

    a1 = conv3x3(x_ref[...], w1_ref, b1_ref)                   # (16, 128)
    a2 = conv3x3(a1, w2_ref, b2_ref)                           # (32, 128)
    a3 = conv3x3(a2, w3_ref, b3_ref)                           # (32, 128)

    # Manual relayout == x3.view(B, -1) on the NCHW tensor:
    #   flat[b, c*HW + hw] = a3[c, b*HW + hw]
    c3 = a3.shape[0]
    for c in range(c3):
        row = a3[c:c + 1, :]                                   # (1, B*HW)
        for b in range(batch):
            flat_ref[b:b + 1, c * HW:(c + 1) * HW] = row[:, b * HW:(b + 1) * HW]

    # Fused dueling head: one matmul over [adv | val | zero-pad] rows of the
    # transposed head weight (8, 2048); contract the lane (K) axis of both
    # operands (q @ k.T form) -> (B, 8).
    head = lax.dot_general(flat_ref[...], wh_ref[...],
                           dimension_numbers=(((1,), (1,)), ((), ())),
                           preferred_element_type=jnp.float32) + bh_ref[...]
    adv = head[:, :n_act]
    val = head[:, n_act:n_act + 1]
    # Reference uses advantage_function.mean() -> mean over ALL elements.
    o_ref[...] = val + (adv - jnp.mean(adv))


def _full_spec(shape):
    ndim = len(shape)
    return pl.BlockSpec(shape, lambda i, _n=ndim: (0,) * _n)


@jax.jit
def intrinsic_model_forward(kparams, x_nchw):
    """Forward pass identical in semantics to IntrinsicModel.forward (NCHW input)."""
    batch, c_in, h, w = x_nchw.shape
    assert (h, w) == (H_IMG, W_IMG) and c_in == C_IN
    m_total = batch * HW

    # Input -> transposed lane-dense layout (C_IN_PAD, B*H*W); tiny one-off prep.
    x_t = jnp.transpose(x_nchw, (1, 0, 2, 3)).reshape(c_in, m_total)
    x_t = jnp.pad(x_t, ((0, C_IN_PAD - c_in), (0, 0)))

    operands = (kparams["masks"], x_t,
                kparams["w1"], kparams["b1"],
                kparams["w2"], kparams["b2"],
                kparams["w3"], kparams["b3"],
                kparams["wh"], kparams["bh"])

    flops = (2 * 9 * m_total * (C1 * C_IN_PAD + C2 * C1 + C3 * C2)
             + 2 * batch * FLAT * HEAD_PAD)
    bytes_accessed = sum(int(op.size) * 4 for op in operands) + batch * ACTIONS * 4

    return pl.pallas_call(
        _fused_forward_kernel,
        out_shape=jax.ShapeDtypeStruct((batch, ACTIONS), jnp.float32),
        grid=(1,),
        in_specs=[_full_spec(op.shape) for op in operands],
        out_specs=pl.BlockSpec((batch, ACTIONS), lambda i: (0, 0)),
        scratch_shapes=[pltpu.VMEM((batch, FLAT), jnp.float32)],
        compiler_params=pltpu.CompilerParams(
            dimension_semantics=("arbitrary",),
            vmem_limit_bytes=32 * 1024 * 1024,
        ),
        cost_estimate=pl.CostEstimate(flops=flops, transcendentals=0,
                                      bytes_accessed=bytes_accessed),
    )(*operands)


# ---------------------------------------------------------------------------
# Parameter init (xavier-normal weights, zero biases, PyTorch layouts) + repack
# ---------------------------------------------------------------------------
def xavier_normal(key, shape, fan_in, fan_out):
    std = math.sqrt(2.0 / (fan_in + fan_out))
    return std * jax.random.normal(key, shape, dtype=jnp.float32)


def init_params(key):
    """Raw parameters in PyTorch layout (matches weight_init)."""
    k1, k2, k3, k4, k5 = jax.random.split(key, 5)
    conv_cfg = [(C_IN, C1), (C1, C2), (C2, C3)]
    params = {}
    for name, k, (cin, cout) in zip(("conv1", "conv2", "conv3"),
                                    (k1, k2, k3), conv_cfg):
        params[name] = {
            "w": xavier_normal(k, (cout, cin, 3, 3), cin * 9, cout * 9),
            "b": jnp.zeros((cout,), jnp.float32),
        }
    params["fc1"] = {"w": xavier_normal(k4, (FLAT, ACTIONS), FLAT, ACTIONS),
                     "b": jnp.zeros((ACTIONS,), jnp.float32)}
    params["val"] = {"w": xavier_normal(k5, (FLAT, 1), FLAT, 1),
                     "b": jnp.zeros((1,), jnp.float32)}
    return params


def _shift_masks(batch):
    """(9, B*H*W) validity masks for the 9 taps of a 3x3 / pad-1 conv."""
    m = jnp.arange(batch * HW)
    hh = (m % HW) // W_IMG
    ww = m % W_IMG
    rows = []
    for idx in range(9):
        dy, dx = idx // 3 - 1, idx % 3 - 1
        valid = ((hh + dy >= 0) & (hh + dy < H_IMG)
                 & (ww + dx >= 0) & (ww + dx < W_IMG))
        rows.append(valid.astype(jnp.float32))
    return jnp.stack(rows, axis=0)


def prepare_kernel_params(params, batch):
    """Repack raw params into the lane-dense layouts the fused kernel consumes."""
    def pack_conv(wt, cin_pad):
        # (Cout, Cin, 3, 3) -> lane-dense (Cout, 9*Cin_pad) with tap index
        # ordered as ky*3+kx (matches the kernel's tap stacking order).
        cout, cin, kh, kw = wt.shape
        w_t = jnp.transpose(wt, (0, 2, 3, 1))                  # (Cout, KH, KW, Cin)
        if cin_pad > cin:
            w_t = jnp.pad(w_t, ((0, 0), (0, 0), (0, 0), (0, cin_pad - cin)))
        return w_t.reshape(cout, kh * kw * cin_pad)

    kp = {
        "w1": pack_conv(params["conv1"]["w"], C_IN_PAD),       # (16, 72)
        "b1": params["conv1"]["b"].reshape(-1, 1),
        "w2": pack_conv(params["conv2"]["w"], C1),             # (32, 144)
        "b2": params["conv2"]["b"].reshape(-1, 1),
        "w3": pack_conv(params["conv3"]["w"], C2),             # (32, 288)
        "b3": params["conv3"]["b"].reshape(-1, 1),
        "masks": _shift_masks(batch),
    }
    # Merged dueling head, stored TRANSPOSED (HEAD_PAD, FLAT) for a lane-dense
    # layout (minor dim 2048), consumed via dot_general contracting lanes.
    wh = jnp.concatenate([params["fc1"]["w"], params["val"]["w"]], axis=1)   # (FLAT, 5)
    wh = jnp.pad(wh, ((0, 0), (0, HEAD_PAD - HEAD_OUT)))                     # (FLAT, 8)
    kp["wh"] = jnp.transpose(wh)                                             # (8, FLAT)
    bh = jnp.concatenate([params["fc1"]["b"], params["val"]["b"]])           # (5,)
    kp["bh"] = jnp.pad(bh, (0, HEAD_PAD - HEAD_OUT)).reshape(1, HEAD_PAD)
    return kp


# ---------------------------------------------------------------------------
# Pure-JAX reference (for correctness verification only)
# ---------------------------------------------------------------------------
def reference_forward(params, x_nchw):
    act = x_nchw
    for name in ("conv1", "conv2", "conv3"):
        w = params[name]["w"]
        b = params[name]["b"]
        act = lax.conv_general_dilated(
            act, w, window_strides=(1, 1), padding=((1, 1), (1, 1)),
            dimension_numbers=("NCHW", "OIHW", "NCHW"),
            precision=lax.Precision.HIGHEST)
        act = act + b.reshape(1, -1, 1, 1)
        act = jnp.where(act >= 0.0, act, NEG_SLOPE * act)
    x3 = act.reshape(act.shape[0], -1)
    adv = jnp.dot(x3, params["fc1"]["w"],
                  precision=lax.Precision.HIGHEST) + params["fc1"]["b"]
    val = jnp.dot(x3, params["val"]["w"],
                  precision=lax.Precision.HIGHEST) + params["val"]["b"]
    return val + (adv - jnp.mean(adv))


# ---------------------------------------------------------------------------
if __name__ == "__main__":
    key = jax.random.PRNGKey(0)
    k_param, k_input = jax.random.split(key)

    params = init_params(k_param)
    kparams = prepare_kernel_params(params, BATCH)
    x = jax.random.normal(k_input, (BATCH, C_IN, H_IMG, W_IMG), dtype=jnp.float32)

    out = intrinsic_model_forward(kparams, x)
    jax.block_until_ready(out)
    assert out.shape == (BATCH, ACTIONS)

    ref = reference_forward(params, x)
    max_err = float(jnp.max(jnp.abs(out - ref)))
    assert max_err < 2e-2, f"mismatch vs reference: {max_err}"

    print("KERNEL_OK")
</pallas_src>

<mosaic_0001>
module attributes {stable_mosaic.version = 11 : i64} {
  func.func @_fused_forward_kernel(%arg0: i32, %arg1: memref<9x128xf32, #tpu.memory_space<vmem>>, %arg2: memref<8x128xf32, #tpu.memory_space<vmem>>, %arg3: memref<16x72xf32, #tpu.memory_space<vmem>>, %arg4: memref<16x1xf32, #tpu.memory_space<vmem>>, %arg5: memref<32x144xf32, #tpu.memory_space<vmem>>, %arg6: memref<32x1xf32, #tpu.memory_space<vmem>>, %arg7: memref<32x288xf32, #tpu.memory_space<vmem>>, %arg8: memref<32x1xf32, #tpu.memory_space<vmem>>, %arg9: memref<8x2048xf32, #tpu.memory_space<vmem>>, %arg10: memref<1x8xf32, #tpu.memory_space<vmem>>, %arg11: memref<2x4xf32, #tpu.memory_space<vmem>>, %arg12: memref<2x2048xf32, #tpu.memory_space<vmem>>) attributes {dimension_semantics = [#tpu.dimension_semantics<arbitrary>], iteration_bounds = array<i64: 1>, scalar_prefetch = 0 : i64, scratch_operands = 1 : i64, tpu.core_type = #tpu.core_type<tc>, window_params = [{pipeline_mode = #tpu.pipeline_mode<synchronous>, transform_indices = @transform_0, window_bounds = array<i64: 9, 128>}, {pipeline_mode = #tpu.pipeline_mode<synchronous>, transform_indices = @transform_1, window_bounds = array<i64: 8, 128>}, {pipeline_mode = #tpu.pipeline_mode<synchronous>, transform_indices = @transform_2, window_bounds = array<i64: 16, 72>}, {pipeline_mode = #tpu.pipeline_mode<synchronous>, transform_indices = @transform_3, window_bounds = array<i64: 16, 1>}, {pipeline_mode = #tpu.pipeline_mode<synchronous>, transform_indices = @transform_4, window_bounds = array<i64: 32, 144>}, {pipeline_mode = #tpu.pipeline_mode<synchronous>, transform_indices = @transform_5, window_bounds = array<i64: 32, 1>}, {pipeline_mode = #tpu.pipeline_mode<synchronous>, transform_indices = @transform_6, window_bounds = array<i64: 32, 288>}, {pipeline_mode = #tpu.pipeline_mode<synchronous>, transform_indices = @transform_7, window_bounds = array<i64: 32, 1>}, {pipeline_mode = #tpu.pipeline_mode<synchronous>, transform_indices = @transform_8, window_bounds = array<i64: 8, 2048>}, {pipeline_mode = #tpu.pipeline_mode<synchronous>, transform_indices = @transform_9, window_bounds = array<i64: 1, 8>}, {pipeline_mode = #tpu.pipeline_mode<synchronous>, transform_indices = @transform_10, window_bounds = array<i64: 2, 4>}]} {
    %c0 = arith.constant 0 : index
    %c0_0 = arith.constant 0 : index
    %0 = vector.load %arg2[%c0, %c0_0] : memref<8x128xf32, #tpu.memory_space<vmem>>, vector<8x128xf32>
    %1 = tpu.concatenate %0, %0 in 1 : vector<8x128xf32>, vector<8x128xf32> -> vector<8x256xf32>
    %2 = vector.extract_strided_slice %1 {offsets = [0, 119], sizes = [8, 128], strides = [1, 1]} : vector<8x256xf32> to vector<8x128xf32>
    %c0_1 = arith.constant 0 : index
    %c0_2 = arith.constant 0 : index
    %3 = vector.load %arg1[%c0_1, %c0_2] : memref<9x128xf32, #tpu.memory_space<vmem>>, vector<1x128xf32>
    %4 = vector.broadcast %3 : vector<1x128xf32> to vector<8x128xf32>
    %5 = arith.mulf %2, %4 : vector<8x128xf32>
    %6 = vector.extract_strided_slice %1 {offsets = [0, 120], sizes = [8, 128], strides = [1, 1]} : vector<8x256xf32> to vector<8x128xf32>
    %c1 = arith.constant 1 : index
    %c0_3 = arith.constant 0 : index
    %7 = vector.load %arg1[%c1, %c0_3] : memref<9x128xf32, #tpu.memory_space<vmem>>, vector<1x128xf32>
    %8 = vector.broadcast %7 : vector<1x128xf32> to vector<8x128xf32>
    %9 = arith.mulf %6, %8 : vector<8x128xf32>
    %10 = vector.extract_strided_slice %1 {offsets = [0, 121], sizes = [8, 128], strides = [1, 1]} : vector<8x256xf32> to vector<8x128xf32>
    %c2 = arith.constant 2 : index
    %c0_4 = arith.constant 0 : index
    %11 = vector.load %arg1[%c2, %c0_4] : memref<9x128xf32, #tpu.memory_space<vmem>>, vector<1x128xf32>
    %12 = vector.broadcast %11 : vector<1x128xf32> to vector<8x128xf32>
    %13 = arith.mulf %10, %12 : vector<8x128xf32>
    %14 = vector.extract_strided_slice %1 {offsets = [0, 127], sizes = [8, 128], strides = [1, 1]} : vector<8x256xf32> to vector<8x128xf32>
    %c3 = arith.constant 3 : index
    %c0_5 = arith.constant 0 : index
    %15 = vector.load %arg1[%c3, %c0_5] : memref<9x128xf32, #tpu.memory_space<vmem>>, vector<1x128xf32>
    %16 = vector.broadcast %15 : vector<1x128xf32> to vector<8x128xf32>
    %17 = arith.mulf %14, %16 : vector<8x128xf32>
    %18 = vector.extract_strided_slice %1 {offsets = [0, 1], sizes = [8, 128], strides = [1, 1]} : vector<8x256xf32> to vector<8x128xf32>
    %c5 = arith.constant 5 : index
    %c0_6 = arith.constant 0 : index
    %19 = vector.load %arg1[%c5, %c0_6] : memref<9x128xf32, #tpu.memory_space<vmem>>, vector<1x128xf32>
    %20 = vector.broadcast %19 : vector<1x128xf32> to vector<8x128xf32>
    %21 = arith.mulf %18, %20 : vector<8x128xf32>
    %22 = vector.extract_strided_slice %1 {offsets = [0, 7], sizes = [8, 128], strides = [1, 1]} : vector<8x256xf32> to vector<8x128xf32>
    %c6 = arith.constant 6 : index
    %c0_7 = arith.constant 0 : index
    %23 = vector.load %arg1[%c6, %c0_7] : memref<9x128xf32, #tpu.memory_space<vmem>>, vector<1x128xf32>
    %24 = vector.broadcast %23 : vector<1x128xf32> to vector<8x128xf32>
    %25 = arith.mulf %22, %24 : vector<8x128xf32>
    %26 = vector.extract_strided_slice %1 {offsets = [0, 8], sizes = [8, 128], strides = [1, 1]} : vector<8x256xf32> to vector<8x128xf32>
    %c7 = arith.constant 7 : index
    %c0_8 = arith.constant 0 : index
    %27 = vector.load %arg1[%c7, %c0_8] : memref<9x128xf32, #tpu.memory_space<vmem>>, vector<1x128xf32>
    %28 = vector.broadcast %27 : vector<1x128xf32> to vector<8x128xf32>
    %29 = arith.mulf %26, %28 : vector<8x128xf32>
    %30 = vector.extract_strided_slice %1 {offsets = [0, 9], sizes = [8, 128], strides = [1, 1]} : vector<8x256xf32> to vector<8x128xf32>
    %c8 = arith.constant 8 : index
    %c0_9 = arith.constant 0 : index
    %31 = vector.load %arg1[%c8, %c0_9] : memref<9x128xf32, #tpu.memory_space<vmem>>, vector<1x128xf32>
    %32 = vector.broadcast %31 : vector<1x128xf32> to vector<8x128xf32>
    %33 = arith.mulf %30, %32 : vector<8x128xf32>
    %34 = tpu.concatenate %5, %9, %13, %17, %0, %21, %25, %29, %33 in 0 : vector<8x128xf32>, vector<8x128xf32>, vector<8x128xf32>, vector<8x128xf32>, vector<8x128xf32>, vector<8x128xf32>, vector<8x128xf32>, vector<8x128xf32>, vector<8x128xf32> -> vector<72x128xf32>
    %c0_10 = arith.constant 0 : index
    %c0_11 = arith.constant 0 : index
    %35 = vector.load %arg3[%c0_10, %c0_11] : memref<16x72xf32, #tpu.memory_space<vmem>>, vector<16x72xf32>
    %cst = arith.constant dense<0.000000e+00> : vector<16x128xf32>
    %36 = tpu.matmul %35, %34, %cst {dimension_numbers = #tpu.dot_dimension_numbers<[1], [0], [0], [1], [0, 0, 1, 1], [], []>} : vector<16x72xf32>, vector<72x128xf32>, vector<16x128xf32> -> vector<16x128xf32>
    %c0_12 = arith.constant 0 : index
    %c0_13 = arith.constant 0 : index
    %37 = vector.load %arg4[%c0_12, %c0_13] : memref<16x1xf32, #tpu.memory_space<vmem>>, vector<16x1xf32>
    %38 = vector.broadcast %37 : vector<16x1xf32> to vector<16x128xf32>
    %39 = arith.addf %36, %38 : vector<16x128xf32>
    %cst_14 = arith.constant 0.000000e+00 : f32
    %40 = vector.broadcast %cst_14 : f32 to vector<16x128xf32>
    %41 = arith.cmpf oge, %39, %40 : vector<16x128xf32>
    %cst_15 = arith.constant 0.00999999977 : f32
    %42 = vector.broadcast %cst_15 : f32 to vector<16x128xf32>
    %43 = arith.mulf %42, %39 : vector<16x128xf32>
    %44 = arith.select %41, %39, %43 : vector<16x128xi1>, vector<16x128xf32>
    %45 = tpu.concatenate %44, %44 in 1 : vector<16x128xf32>, vector<16x128xf32> -> vector<16x256xf32>
    %46 = vector.extract_strided_slice %45 {offsets = [0, 119], sizes = [16, 128], strides = [1, 1]} : vector<16x256xf32> to vector<16x128xf32>
    %c0_16 = arith.constant 0 : index
    %c0_17 = arith.constant 0 : index
    %47 = vector.load %arg1[%c0_16, %c0_17] : memref<9x128xf32, #tpu.memory_space<vmem>>, vector<1x128xf32>
    %48 = vector.broadcast %47 : vector<1x128xf32> to vector<16x128xf32>
    %49 = arith.mulf %46, %48 : vector<16x128xf32>
    %50 = vector.extract_strided_slice %45 {offsets = [0, 120], sizes = [16, 128], strides = [1, 1]} : vector<16x256xf32> to vector<16x128xf32>
    %c1_18 = arith.constant 1 : index
    %c0_19 = arith.constant 0 : index
    %51 = vector.load %arg1[%c1_18, %c0_19] : memref<9x128xf32, #tpu.memory_space<vmem>>, vector<1x128xf32>
    %52 = vector.broadcast %51 : vector<1x128xf32> to vector<16x128xf32>
    %53 = arith.mulf %50, %52 : vector<16x128xf32>
    %54 = vector.extract_strided_slice %45 {offsets = [0, 121], sizes = [16, 128], strides = [1, 1]} : vector<16x256xf32> to vector<16x128xf32>
    %c2_20 = arith.constant 2 : index
    %c0_21 = arith.constant 0 : index
    %55 = vector.load %arg1[%c2_20, %c0_21] : memref<9x128xf32, #tpu.memory_space<vmem>>, vector<1x128xf32>
    %56 = vector.broadcast %55 : vector<1x128xf32> to vector<16x128xf32>
    %57 = arith.mulf %54, %56 : vector<16x128xf32>
    %58 = vector.extract_strided_slice %45 {offsets = [0, 127], sizes = [16, 128], strides = [1, 1]} : vector<16x256xf32> to vector<16x128xf32>
    %c3_22 = arith.constant 3 : index
    %c0_23 = arith.constant 0 : index
    %59 = vector.load %arg1[%c3_22, %c0_23] : memref<9x128xf32, #tpu.memory_space<vmem>>, vector<1x128xf32>
    %60 = vector.broadcast %59 : vector<1x128xf32> to vector<16x128xf32>
    %61 = arith.mulf %58, %60 : vector<16x128xf32>
    %62 = vector.extract_strided_slice %45 {offsets = [0, 1], sizes = [16, 128], strides = [1, 1]} : vector<16x256xf32> to vector<16x128xf32>
    %c5_24 = arith.constant 5 : index
    %c0_25 = arith.constant 0 : index
    %63 = vector.load %arg1[%c5_24, %c0_25] : memref<9x128xf32, #tpu.memory_space<vmem>>, vector<1x128xf32>
    %64 = vector.broadcast %63 : vector<1x128xf32> to vector<16x128xf32>
    %65 = arith.mulf %62, %64 : vector<16x128xf32>
    %66 = vector.extract_strided_slice %45 {offsets = [0, 7], sizes = [16, 128], strides = [1, 1]} : vector<16x256xf32> to vector<16x128xf32>
    %c6_26 = arith.constant 6 : index
    %c0_27 = arith.constant 0 : index
    %67 = vector.load %arg1[%c6_26, %c0_27] : memref<9x128xf32, #tpu.memory_space<vmem>>, vector<1x128xf32>
    %68 = vector.broadcast %67 : vector<1x128xf32> to vector<16x128xf32>
    %69 = arith.mulf %66, %68 : vector<16x128xf32>
    %70 = vector.extract_strided_slice %45 {offsets = [0, 8], sizes = [16, 128], strides = [1, 1]} : vector<16x256xf32> to vector<16x128xf32>
    %c7_28 = arith.constant 7 : index
    %c0_29 = arith.constant 0 : index
    %71 = vector.load %arg1[%c7_28, %c0_29] : memref<9x128xf32, #tpu.memory_space<vmem>>, vector<1x128xf32>
    %72 = vector.broadcast %71 : vector<1x128xf32> to vector<16x128xf32>
    %73 = arith.mulf %70, %72 : vector<16x128xf32>
    %74 = vector.extract_strided_slice %45 {offsets = [0, 9], sizes = [16, 128], strides = [1, 1]} : vector<16x256xf32> to vector<16x128xf32>
    %c8_30 = arith.constant 8 : index
    %c0_31 = arith.constant 0 : index
    %75 = vector.load %arg1[%c8_30, %c0_31] : memref<9x128xf32, #tpu.memory_space<vmem>>, vector<1x128xf32>
    %76 = vector.broadcast %75 : vector<1x128xf32> to vector<16x128xf32>
    %77 = arith.mulf %74, %76 : vector<16x128xf32>
    %78 = tpu.concatenate %49, %53, %57, %61, %44, %65, %69, %73, %77 in 0 : vector<16x128xf32>, vector<16x128xf32>, vector<16x128xf32>, vector<16x128xf32>, vector<16x128xf32>, vector<16x128xf32>, vector<16x128xf32>, vector<16x128xf32>, vector<16x128xf32> -> vector<144x128xf32>
    %c0_32 = arith.constant 0 : index
    %c0_33 = arith.constant 0 : index
    %79 = vector.load %arg5[%c0_32, %c0_33] : memref<32x144xf32, #tpu.memory_space<vmem>>, vector<32x144xf32>
    %cst_34 = arith.constant dense<0.000000e+00> : vector<32x128xf32>
    %80 = tpu.matmul %79, %78, %cst_34 {dimension_numbers = #tpu.dot_dimension_numbers<[1], [0], [0], [1], [0, 0, 1, 1], [], []>} : vector<32x144xf32>, vector<144x128xf32>, vector<32x128xf32> -> vector<32x128xf32>
    %c0_35 = arith.constant 0 : index
    %c0_36 = arith.constant 0 : index
    %81 = vector.load %arg6[%c0_35, %c0_36] : memref<32x1xf32, #tpu.memory_space<vmem>>, vector<32x1xf32>
    %82 = vector.broadcast %81 : vector<32x1xf32> to vector<32x128xf32>
    %83 = arith.addf %80, %82 : vector<32x128xf32>
    %cst_37 = arith.constant 0.000000e+00 : f32
    %84 = vector.broadcast %cst_37 : f32 to vector<32x128xf32>
    %85 = arith.cmpf oge, %83, %84 : vector<32x128xf32>
    %cst_38 = arith.constant 0.00999999977 : f32
    %86 = vector.broadcast %cst_38 : f32 to vector<32x128xf32>
    %87 = arith.mulf %86, %83 : vector<32x128xf32>
    %88 = arith.select %85, %83, %87 : vector<32x128xi1>, vector<32x128xf32>
    %89 = tpu.concatenate %88, %88 in 1 : vector<32x128xf32>, vector<32x128xf32> -> vector<32x256xf32>
    %90 = vector.extract_strided_slice %89 {offsets = [0, 119], sizes = [32, 128], strides = [1, 1]} : vector<32x256xf32> to vector<32x128xf32>
    %c0_39 = arith.constant 0 : index
    %c0_40 = arith.constant 0 : index
    %91 = vector.load %arg1[%c0_39, %c0_40] : memref<9x128xf32, #tpu.memory_space<vmem>>, vector<1x128xf32>
    %92 = vector.broadcast %91 : vector<1x128xf32> to vector<32x128xf32>
    %93 = arith.mulf %90, %92 : vector<32x128xf32>
    %94 = vector.extract_strided_slice %89 {offsets = [0, 120], sizes = [32, 128], strides = [1, 1]} : vector<32x256xf32> to vector<32x128xf32>
    %c1_41 = arith.constant 1 : index
    %c0_42 = arith.constant 0 : index
    %95 = vector.load %arg1[%c1_41, %c0_42] : memref<9x128xf32, #tpu.memory_space<vmem>>, vector<1x128xf32>
    %96 = vector.broadcast %95 : vector<1x128xf32> to vector<32x128xf32>
    %97 = arith.mulf %94, %96 : vector<32x128xf32>
    %98 = vector.extract_strided_slice %89 {offsets = [0, 121], sizes = [32, 128], strides = [1, 1]} : vector<32x256xf32> to vector<32x128xf32>
    %c2_43 = arith.constant 2 : index
    %c0_44 = arith.constant 0 : index
    %99 = vector.load %arg1[%c2_43, %c0_44] : memref<9x128xf32, #tpu.memory_space<vmem>>, vector<1x128xf32>
    %100 = vector.broadcast %99 : vector<1x128xf32> to vector<32x128xf32>
    %101 = arith.mulf %98, %100 : vector<32x128xf32>
    %102 = vector.extract_strided_slice %89 {offsets = [0, 127], sizes = [32, 128], strides = [1, 1]} : vector<32x256xf32> to vector<32x128xf32>
    %c3_45 = arith.constant 3 : index
    %c0_46 = arith.constant 0 : index
    %103 = vector.load %arg1[%c3_45, %c0_46] : memref<9x128xf32, #tpu.memory_space<vmem>>, vector<1x128xf32>
    %104 = vector.broadcast %103 : vector<1x128xf32> to vector<32x128xf32>
    %105 = arith.mulf %102, %104 : vector<32x128xf32>
    %106 = vector.extract_strided_slice %89 {offsets = [0, 1], sizes = [32, 128], strides = [1, 1]} : vector<32x256xf32> to vector<32x128xf32>
    %c5_47 = arith.constant 5 : index
    %c0_48 = arith.constant 0 : index
    %107 = vector.load %arg1[%c5_47, %c0_48] : memref<9x128xf32, #tpu.memory_space<vmem>>, vector<1x128xf32>
    %108 = vector.broadcast %107 : vector<1x128xf32> to vector<32x128xf32>
    %109 = arith.mulf %106, %108 : vector<32x128xf32>
    %110 = vector.extract_strided_slice %89 {offsets = [0, 7], sizes = [32, 128], strides = [1, 1]} : vector<32x256xf32> to vector<32x128xf32>
    %c6_49 = arith.constant 6 : index
    %c0_50 = arith.constant 0 : index
    %111 = vector.load %arg1[%c6_49, %c0_50] : memref<9x128xf32, #tpu.memory_space<vmem>>, vector<1x128xf32>
    %112 = vector.broadcast %111 : vector<1x128xf32> to vector<32x128xf32>
    %113 = arith.mulf %110, %112 : vector<32x128xf32>
    %114 = vector.extract_strided_slice %89 {offsets = [0, 8], sizes = [32, 128], strides = [1, 1]} : vector<32x256xf32> to vector<32x128xf32>
    %c7_51 = arith.constant 7 : index
    %c0_52 = arith.constant 0 : index
    %115 = vector.load %arg1[%c7_51, %c0_52] : memref<9x128xf32, #tpu.memory_space<vmem>>, vector<1x128xf32>
    %116 = vector.broadcast %115 : vector<1x128xf32> to vector<32x128xf32>
    %117 = arith.mulf %114, %116 : vector<32x128xf32>
    %118 = vector.extract_strided_slice %89 {offsets = [0, 9], sizes = [32, 128], strides = [1, 1]} : vector<32x256xf32> to vector<32x128xf32>
    %c8_53 = arith.constant 8 : index
    %c0_54 = arith.constant 0 : index
    %119 = vector.load %arg1[%c8_53, %c0_54] : memref<9x128xf32, #tpu.memory_space<vmem>>, vector<1x128xf32>
    %120 = vector.broadcast %119 : vector<1x128xf32> to vector<32x128xf32>
    %121 = arith.mulf %118, %120 : vector<32x128xf32>
    %122 = tpu.concatenate %93, %97, %101, %105, %88, %109, %113, %117, %121 in 0 : vector<32x128xf32>, vector<32x128xf32>, vector<32x128xf32>, vector<32x128xf32>, vector<32x128xf32>, vector<32x128xf32>, vector<32x128xf32>, vector<32x128xf32>, vector<32x128xf32> -> vector<288x128xf32>
    %c0_55 = arith.constant 0 : index
    %c0_56 = arith.constant 0 : index
    %123 = vector.load %arg7[%c0_55, %c0_56] : memref<32x288xf32, #tpu.memory_space<vmem>>, vector<32x288xf32>
    %cst_57 = arith.constant dense<0.000000e+00> : vector<32x128xf32>
    %124 = tpu.matmul %123, %122, %cst_57 {dimension_numbers = #tpu.dot_dimension_numbers<[1], [0], [0], [1], [0, 0, 1, 1], [], []>} : vector<32x288xf32>, vector<288x128xf32>, vector<32x128xf32> -> vector<32x128xf32>
    %c0_58 = arith.constant 0 : index
    %c0_59 = arith.constant 0 : index
    %125 = vector.load %arg8[%c0_58, %c0_59] : memref<32x1xf32, #tpu.memory_space<vmem>>, vector<32x1xf32>
    %126 = vector.broadcast %125 : vector<32x1xf32> to vector<32x128xf32>
    %127 = arith.addf %124, %126 : vector<32x128xf32>
    %cst_60 = arith.constant 0.000000e+00 : f32
    %128 = vector.broadcast %cst_60 : f32 to vector<32x128xf32>
    %129 = arith.cmpf oge, %127, %128 : vector<32x128xf32>
    %cst_61 = arith.constant 0.00999999977 : f32
    %130 = vector.broadcast %cst_61 : f32 to vector<32x128xf32>
    %131 = arith.mulf %130, %127 : vector<32x128xf32>
    %132 = arith.select %129, %127, %131 : vector<32x128xi1>, vector<32x128xf32>
    %133 = vector.extract_strided_slice %132 {offsets = [0, 0], sizes = [1, 128], strides = [1, 1]} : vector<32x128xf32> to vector<1x128xf32>
    %134 = vector.extract_strided_slice %133 {offsets = [0, 0], sizes = [1, 64], strides = [1, 1]} : vector<1x128xf32> to vector<1x64xf32>
    %c0_62 = arith.constant 0 : index
    %c0_63 = arith.constant 0 : index
    %135 = vector.load %arg12[%c0_62, %c0_63] : memref<2x2048xf32, #tpu.memory_space<vmem>>, vector<1x64xf32>
    tpu.vector_store %arg12[%c0_62, %c0_63], %134 {strides = array<i32>} : memref<2x2048xf32, #tpu.memory_space<vmem>>, vector<1x64xf32>,
    %136 = vector.extract_strided_slice %133 {offsets = [0, 64], sizes = [1, 64], strides = [1, 1]} : vector<1x128xf32> to vector<1x64xf32>
    %c1_64 = arith.constant 1 : index
    %c0_65 = arith.constant 0 : index
    %137 = vector.load %arg12[%c1_64, %c0_65] : memref<2x2048xf32, #tpu.memory_space<vmem>>, vector<1x64xf32>
    tpu.vector_store %arg12[%c1_64, %c0_65], %136 {strides = array<i32>} : memref<2x2048xf32, #tpu.memory_space<vmem>>, vector<1x64xf32>,
    %138 = vector.extract_strided_slice %132 {offsets = [1, 0], sizes = [1, 128], strides = [1, 1]} : vector<32x128xf32> to vector<1x128xf32>
    %139 = vector.extract_strided_slice %138 {offsets = [0, 0], sizes = [1, 64], strides = [1, 1]} : vector<1x128xf32> to vector<1x64xf32>
    %c0_66 = arith.constant 0 : index
    %c64 = arith.constant 64 : index
    %140 = vector.load %arg12[%c0_66, %c64] : memref<2x2048xf32, #tpu.memory_space<vmem>>, vector<1x64xf32>
    tpu.vector_store %arg12[%c0_66, %c64], %139 {strides = array<i32>} : memref<2x2048xf32, #tpu.memory_space<vmem>>, vector<1x64xf32>,
    %141 = vector.extract_strided_slice %138 {offsets = [0, 64], sizes = [1, 64], strides = [1, 1]} : vector<1x128xf32> to vector<1x64xf32>
    %c1_67 = arith.constant 1 : index
    %c64_68 = arith.constant 64 : index
    %142 = vector.load %arg12[%c1_67, %c64_68] : memref<2x2048xf32, #tpu.memory_space<vmem>>, vector<1x64xf32>
    tpu.vector_store %arg12[%c1_67, %c64_68], %141 {strides = array<i32>} : memref<2x2048xf32, #tpu.memory_space<vmem>>, vector<1x64xf32>,
    %143 = vector.extract_strided_slice %132 {offsets = [2, 0], sizes = [1, 128], strides = [1, 1]} : vector<32x128xf32> to vector<1x128xf32>
    %144 = vector.extract_strided_slice %143 {offsets = [0, 0], sizes = [1, 64], strides = [1, 1]} : vector<1x128xf32> to vector<1x64xf32>
    %c0_69 = arith.constant 0 : index
    %c128 = arith.constant 128 : index
    %145 = vector.load %arg12[%c0_69, %c128] : memref<2x2048xf32, #tpu.memory_space<vmem>>, vector<1x64xf32>
    tpu.vector_store %arg12[%c0_69, %c128], %144 {strides = array<i32>} : memref<2x2048xf32, #tpu.memory_space<vmem>>, vector<1x64xf32>,
    %146 = vector.extract_strided_slice %143 {offsets = [0, 64], sizes = [1, 64], strides = [1, 1]} : vector<1x128xf32> to vector<1x64xf32>
    %c1_70 = arith.constant 1 : index
    %c128_71 = arith.constant 128 : index
    %147 = vector.load %arg12[%c1_70, %c128_71] : memref<2x2048xf32, #tpu.memory_space<vmem>>, vector<1x64xf32>
    tpu.vector_store %arg12[%c1_70, %c128_71], %146 {strides = array<i32>} : memref<2x2048xf32, #tpu.memory_space<vmem>>, vector<1x64xf32>,
    %148 = vector.extract_strided_slice %132 {offsets = [3, 0], sizes = [1, 128], strides = [1, 1]} : vector<32x128xf32> to vector<1x128xf32>
    %149 = vector.extract_strided_slice %148 {offsets = [0, 0], sizes = [1, 64], strides = [1, 1]} : vector<1x128xf32> to vector<1x64xf32>
    %c0_72 = arith.constant 0 : index
    %c192 = arith.constant 192 : index
    %150 = vector.load %arg12[%c0_72, %c192] : memref<2x2048xf32, #tpu.memory_space<vmem>>, vector<1x64xf32>
    tpu.vector_store %arg12[%c0_72, %c192], %149 {strides = array<i32>} : memref<2x2048xf32, #tpu.memory_space<vmem>>, vector<1x64xf32>,
    %151 = vector.extract_strided_slice %148 {offsets = [0, 64], sizes = [1, 64], strides = [1, 1]} : vector<1x128xf32> to vector<1x64xf32>
    %c1_73 = arith.constant 1 : index
    %c192_74 = arith.constant 192 : index
    %152 = vector.load %arg12[%c1_73, %c192_74] : memref<2x2048xf32, #tpu.memory_space<vmem>>, vector<1x64xf32>
    tpu.vector_store %arg12[%c1_73, %c192_74], %151 {strides = array<i32>} : memref<2x2048xf32, #tpu.memory_space<vmem>>, vector<1x64xf32>,
    %153 = vector.extract_strided_slice %132 {offsets = [4, 0], sizes = [1, 128], strides = [1, 1]} : vector<32x128xf32> to vector<1x128xf32>
    %154 = vector.extract_strided_slice %153 {offsets = [0, 0], sizes = [1, 64], strides = [1, 1]} : vector<1x128xf32> to vector<1x64xf32>
    %c0_75 = arith.constant 0 : index
    %c256 = arith.constant 256 : index
    %155 = vector.load %arg12[%c0_75, %c256] : memref<2x2048xf32, #tpu.memory_space<vmem>>, vector<1x64xf32>
    tpu.vector_store %arg12[%c0_75, %c256], %154 {strides = array<i32>} : memref<2x2048xf32, #tpu.memory_space<vmem>>, vector<1x64xf32>,
    %156 = vector.extract_strided_slice %153 {offsets = [0, 64], sizes = [1, 64], strides = [1, 1]} : vector<1x128xf32> to vector<1x64xf32>
    %c1_76 = arith.constant 1 : index
    %c256_77 = arith.constant 256 : index
    %157 = vector.load %arg12[%c1_76, %c256_77] : memref<2x2048xf32, #tpu.memory_space<vmem>>, vector<1x64xf32>
    tpu.vector_store %arg12[%c1_76, %c256_77], %156 {strides = array<i32>} : memref<2x2048xf32, #tpu.memory_space<vmem>>, vector<1x64xf32>,
    %158 = vector.extract_strided_slice %132 {offsets = [5, 0], sizes = [1, 128], strides = [1, 1]} : vector<32x128xf32> to vector<1x128xf32>
    %159 = vector.extract_strided_slice %158 {offsets = [0, 0], sizes = [1, 64], strides = [1, 1]} : vector<1x128xf32> to vector<1x64xf32>
    %c0_78 = arith.constant 0 : index
    %c320 = arith.constant 320 : index
    %160 = vector.load %arg12[%c0_78, %c320] : memref<2x2048xf32, #tpu.memory_space<vmem>>, vector<1x64xf32>
    tpu.vector_store %arg12[%c0_78, %c320], %159 {strides = array<i32>} : memref<2x2048xf32, #tpu.memory_space<vmem>>, vector<1x64xf32>,
    %161 = vector.extract_strided_slice %158 {offsets = [0, 64], sizes = [1, 64], strides = [1, 1]} : vector<1x128xf32> to vector<1x64xf32>
    %c1_79 = arith.constant 1 : index
    %c320_80 = arith.constant 320 : index
    %162 = vector.load %arg12[%c1_79, %c320_80] : memref<2x2048xf32, #tpu.memory_space<vmem>>, vector<1x64xf32>
    tpu.vector_store %arg12[%c1_79, %c320_80], %161 {strides = array<i32>} : memref<2x2048xf32, #tpu.memory_space<vmem>>, vector<1x64xf32>,
    %163 = vector.extract_strided_slice %132 {offsets = [6, 0], sizes = [1, 128], strides = [1, 1]} : vector<32x128xf32> to vector<1x128xf32>
    %164 = vector.extract_strided_slice %163 {offsets = [0, 0], sizes = [1, 64], strides = [1, 1]} : vector<1x128xf32> to vector<1x64xf32>
    %c0_81 = arith.constant 0 : index
    %c384 = arith.constant 384 : index
    %165 = vector.load %arg12[%c0_81, %c384] : memref<2x2048xf32, #tpu.memory_space<vmem>>, vector<1x64xf32>
    tpu.vector_store %arg12[%c0_81, %c384], %164 {strides = array<i32>} : memref<2x2048xf32, #tpu.memory_space<vmem>>, vector<1x64xf32>,
    %166 = vector.extract_strided_slice %163 {offsets = [0, 64], sizes = [1, 64], strides = [1, 1]} : vector<1x128xf32> to vector<1x64xf32>
    %c1_82 = arith.constant 1 : index
    %c384_83 = arith.constant 384 : index
    %167 = vector.load %arg12[%c1_82, %c384_83] : memref<2x2048xf32, #tpu.memory_space<vmem>>, vector<1x64xf32>
    tpu.vector_store %arg12[%c1_82, %c384_83], %166 {strides = array<i32>} : memref<2x2048xf32, #tpu.memory_space<vmem>>, vector<1x64xf32>,
    %168 = vector.extract_strided_slice %132 {offsets = [7, 0], sizes = [1, 128], strides = [1, 1]} : vector<32x128xf32> to vector<1x128xf32>
    %169 = vector.extract_strided_slice %168 {offsets = [0, 0], sizes = [1, 64], strides = [1, 1]} : vector<1x128xf32> to vector<1x64xf32>
    %c0_84 = arith.constant 0 : index
    %c448 = arith.constant 448 : index
    %170 = vector.load %arg12[%c0_84, %c448] : memref<2x2048xf32, #tpu.memory_space<vmem>>, vector<1x64xf32>
    tpu.vector_store %arg12[%c0_84, %c448], %169 {strides = array<i32>} : memref<2x2048xf32, #tpu.memory_space<vmem>>, vector<1x64xf32>,
    %171 = vector.extract_strided_slice %168 {offsets = [0, 64], sizes = [1, 64], strides = [1, 1]} : vector<1x128xf32> to vector<1x64xf32>
    %c1_85 = arith.constant 1 : index
    %c448_86 = arith.constant 448 : index
    %172 = vector.load %arg12[%c1_85, %c448_86] : memref<2x2048xf32, #tpu.memory_space<vmem>>, vector<1x64xf32>
    tpu.vector_store %arg12[%c1_85, %c448_86], %171 {strides = array<i32>} : memref<2x2048xf32, #tpu.memory_space<vmem>>, vector<1x64xf32>,
    %173 = vector.extract_strided_slice %132 {offsets = [8, 0], sizes = [1, 128], strides = [1, 1]} : vector<32x128xf32> to vector<1x128xf32>
    %174 = vector.extract_strided_slice %173 {offsets = [0, 0], sizes = [1, 64], strides = [1, 1]} : vector<1x128xf32> to vector<1x64xf32>
    %c0_87 = arith.constant 0 : index
    %c512 = arith.constant 512 : index
    %175 = vector.load %arg12[%c0_87, %c512] : memref<2x2048xf32, #tpu.memory_space<vmem>>, vector<1x64xf32>
    tpu.vector_store %arg12[%c0_87, %c512], %174 {strides = array<i32>} : memref<2x2048xf32, #tpu.memory_space<vmem>>, vector<1x64xf32>,
    %176 = vector.extract_strided_slice %173 {offsets = [0, 64], sizes = [1, 64], strides = [1, 1]} : vector<1x128xf32> to vector<1x64xf32>
    %c1_88 = arith.constant 1 : index
    %c512_89 = arith.constant 512 : index
    %177 = vector.load %arg12[%c1_88, %c512_89] : memref<2x2048xf32, #tpu.memory_space<vmem>>, vector<1x64xf32>
    tpu.vector_store %arg12[%c1_88, %c512_89], %176 {strides = array<i32>} : memref<2x2048xf32, #tpu.memory_space<vmem>>, vector<1x64xf32>,
    %178 = vector.extract_strided_slice %132 {offsets = [9, 0], sizes = [1, 128], strides = [1, 1]} : vector<32x128xf32> to vector<1x128xf32>
    %179 = vector.extract_strided_slice %178 {offsets = [0, 0], sizes = [1, 64], strides = [1, 1]} : vector<1x128xf32> to vector<1x64xf32>
    %c0_90 = arith.constant 0 : index
    %c576 = arith.constant 576 : index
    %180 = vector.load %arg12[%c0_90, %c576] : memref<2x2048xf32, #tpu.memory_space<vmem>>, vector<1x64xf32>
    tpu.vector_store %arg12[%c0_90, %c576], %179 {strides = array<i32>} : memref<2x2048xf32, #tpu.memory_space<vmem>>, vector<1x64xf32>,
    %181 = vector.extract_strided_slice %178 {offsets = [0, 64], sizes = [1, 64], strides = [1, 1]} : vector<1x128xf32> to vector<1x64xf32>
    %c1_91 = arith.constant 1 : index
    %c576_92 = arith.constant 576 : index
    %182 = vector.load %arg12[%c1_91, %c576_92] : memref<2x2048xf32, #tpu.memory_space<vmem>>, vector<1x64xf32>
    tpu.vector_store %arg12[%c1_91, %c576_92], %181 {strides = array<i32>} : memref<2x2048xf32, #tpu.memory_space<vmem>>, vector<1x64xf32>,
    %183 = vector.extract_strided_slice %132 {offsets = [10, 0], sizes = [1, 128], strides = [1, 1]} : vector<32x128xf32> to vector<1x128xf32>
    %184 = vector.extract_strided_slice %183 {offsets = [0, 0], sizes = [1, 64], strides = [1, 1]} : vector<1x128xf32> to vector<1x64xf32>
    %c0_93 = arith.constant 0 : index
    %c640 = arith.constant 640 : index
    %185 = vector.load %arg12[%c0_93, %c640] : memref<2x2048xf32, #tpu.memory_space<vmem>>, vector<1x64xf32>
    tpu.vector_store %arg12[%c0_93, %c640], %184 {strides = array<i32>} : memref<2x2048xf32, #tpu.memory_space<vmem>>, vector<1x64xf32>,
    %186 = vector.extract_strided_slice %183 {offsets = [0, 64], sizes = [1, 64], strides = [1, 1]} : vector<1x128xf32> to vector<1x64xf32>
    %c1_94 = arith.constant 1 : index
    %c640_95 = arith.constant 640 : index
    %187 = vector.load %arg12[%c1_94, %c640_95] : memref<2x2048xf32, #tpu.memory_space<vmem>>, vector<1x64xf32>
    tpu.vector_store %arg12[%c1_94, %c640_95], %186 {strides = array<i32>} : memref<2x2048xf32, #tpu.memory_space<vmem>>, vector<1x64xf32>,
    %188 = vector.extract_strided_slice %132 {offsets = [11, 0], sizes = [1, 128], strides = [1, 1]} : vector<32x128xf32> to vector<1x128xf32>
    %189 = vector.extract_strided_slice %188 {offsets = [0, 0], sizes = [1, 64], strides = [1, 1]} : vector<1x128xf32> to vector<1x64xf32>
    %c0_96 = arith.constant 0 : index
    %c704 = arith.constant 704 : index
    %190 = vector.load %arg12[%c0_96, %c704] : memref<2x2048xf32, #tpu.memory_space<vmem>>, vector<1x64xf32>
    tpu.vector_store %arg12[%c0_96, %c704], %189 {strides = array<i32>} : memref<2x2048xf32, #tpu.memory_space<vmem>>, vector<1x64xf32>,
    %191 = vector.extract_strided_slice %188 {offsets = [0, 64], sizes = [1, 64], strides = [1, 1]} : vector<1x128xf32> to vector<1x64xf32>
    %c1_97 = arith.constant 1 : index
    %c704_98 = arith.constant 704 : index
    %192 = vector.load %arg12[%c1_97, %c704_98] : memref<2x2048xf32, #tpu.memory_space<vmem>>, vector<1x64xf32>
    tpu.vector_store %arg12[%c1_97, %c704_98], %191 {strides = array<i32>} : memref<2x2048xf32, #tpu.memory_space<vmem>>, vector<1x64xf32>,
    %193 = vector.extract_strided_slice %132 {offsets = [12, 0], sizes = [1, 128], strides = [1, 1]} : vector<32x128xf32> to vector<1x128xf32>
    %194 = vector.extract_strided_slice %193 {offsets = [0, 0], sizes = [1, 64], strides = [1, 1]} : vector<1x128xf32> to vector<1x64xf32>
    %c0_99 = arith.constant 0 : index
    %c768 = arith.constant 768 : index
    %195 = vector.load %arg12[%c0_99, %c768] : memref<2x2048xf32, #tpu.memory_space<vmem>>, vector<1x64xf32>
    tpu.vector_store %arg12[%c0_99, %c768], %194 {strides = array<i32>} : memref<2x2048xf32, #tpu.memory_space<vmem>>, vector<1x64xf32>,
    %196 = vector.extract_strided_slice %193 {offsets = [0, 64], sizes = [1, 64], strides = [1, 1]} : vector<1x128xf32> to vector<1x64xf32>
    %c1_100 = arith.constant 1 : index
    %c768_101 = arith.constant 768 : index
    %197 = vector.load %arg12[%c1_100, %c768_101] : memref<2x2048xf32, #tpu.memory_space<vmem>>, vector<1x64xf32>
    tpu.vector_store %arg12[%c1_100, %c768_101], %196 {strides = array<i32>} : memref<2x2048xf32, #tpu.memory_space<vmem>>, vector<1x64xf32>,
    %198 = vector.extract_strided_slice %132 {offsets = [13, 0], sizes = [1, 128], strides = [1, 1]} : vector<32x128xf32> to vector<1x128xf32>
    %199 = vector.extract_strided_slice %198 {offsets = [0, 0], sizes = [1, 64], strides = [1, 1]} : vector<1x128xf32> to vector<1x64xf32>
    %c0_102 = arith.constant 0 : index
    %c832 = arith.constant 832 : index
    %200 = vector.load %arg12[%c0_102, %c832] : memref<2x2048xf32, #tpu.memory_space<vmem>>, vector<1x64xf32>
    tpu.vector_store %arg12[%c0_102, %c832], %199 {strides = array<i32>} : memref<2x2048xf32, #tpu.memory_space<vmem>>, vector<1x64xf32>,
    %201 = vector.extract_strided_slice %198 {offsets = [0, 64], sizes = [1, 64], strides = [1, 1]} : vector<1x128xf32> to vector<1x64xf32>
    %c1_103 = arith.constant 1 : index
    %c832_104 = arith.constant 832 : index
    %202 = vector.load %arg12[%c1_103, %c832_104] : memref<2x2048xf32, #tpu.memory_space<vmem>>, vector<1x64xf32>
    tpu.vector_store %arg12[%c1_103, %c832_104], %201 {strides = array<i32>} : memref<2x2048xf32, #tpu.memory_space<vmem>>, vector<1x64xf32>,
    %203 = vector.extract_strided_slice %132 {offsets = [14, 0], sizes = [1, 128], strides = [1, 1]} : vector<32x128xf32> to vector<1x128xf32>
    %204 = vector.extract_strided_slice %203 {offsets = [0, 0], sizes = [1, 64], strides = [1, 1]} : vector<1x128xf32> to vector<1x64xf32>
    %c0_105 = arith.constant 0 : index
    %c896 = arith.constant 896 : index
    %205 = vector.load %arg12[%c0_105, %c896] : memref<2x2048xf32, #tpu.memory_space<vmem>>, vector<1x64xf32>
    tpu.vector_store %arg12[%c0_105, %c896], %204 {strides = array<i32>} : memref<2x2048xf32, #tpu.memory_space<vmem>>, vector<1x64xf32>,
    %206 = vector.extract_strided_slice %203 {offsets = [0, 64], sizes = [1, 64], strides = [1, 1]} : vector<1x128xf32> to vector<1x64xf32>
    %c1_106 = arith.constant 1 : index
    %c896_107 = arith.constant 896 : index
    %207 = vector.load %arg12[%c1_106, %c896_107] : memref<2x2048xf32, #tpu.memory_space<vmem>>, vector<1x64xf32>
    tpu.vector_store %arg12[%c1_106, %c896_107], %206 {strides = array<i32>} : memref<2x2048xf32, #tpu.memory_space<vmem>>, vector<1x64xf32>,
    %208 = vector.extract_strided_slice %132 {offsets = [15, 0], sizes = [1, 128], strides = [1, 1]} : vector<32x128xf32> to vector<1x128xf32>
    %209 = vector.extract_strided_slice %208 {offsets = [0, 0], sizes = [1, 64], strides = [1, 1]} : vector<1x128xf32> to vector<1x64xf32>
    %c0_108 = arith.constant 0 : index
    %c960 = arith.constant 960 : index
    %210 = vector.load %arg12[%c0_108, %c960] : memref<2x2048xf32, #tpu.memory_space<vmem>>, vector<1x64xf32>
    tpu.vector_store %arg12[%c0_108, %c960], %209 {strides = array<i32>} : memref<2x2048xf32, #tpu.memory_space<vmem>>, vector<1x64xf32>,
    %211 = vector.extract_strided_slice %208 {offsets = [0, 64], sizes = [1, 64], strides = [1, 1]} : vector<1x128xf32> to vector<1x64xf32>
    %c1_109 = arith.constant 1 : index
    %c960_110 = arith.constant 960 : index
    %212 = vector.load %arg12[%c1_109, %c960_110] : memref<2x2048xf32, #tpu.memory_space<vmem>>, vector<1x64xf32>
    tpu.vector_store %arg12[%c1_109, %c960_110], %211 {strides = array<i32>} : memref<2x2048xf32, #tpu.memory_space<vmem>>, vector<1x64xf32>,
    %213 = vector.extract_strided_slice %132 {offsets = [16, 0], sizes = [1, 128], strides = [1, 1]} : vector<32x128xf32> to vector<1x128xf32>
    %214 = vector.extract_strided_slice %213 {offsets = [0, 0], sizes = [1, 64], strides = [1, 1]} : vector<1x128xf32> to vector<1x64xf32>
    %c0_111 = arith.constant 0 : index
    %c1024 = arith.constant 1024 : index
    %215 = vector.load %arg12[%c0_111, %c1024] : memref<2x2048xf32, #tpu.memory_space<vmem>>, vector<1x64xf32>
    tpu.vector_store %arg12[%c0_111, %c1024], %214 {strides = array<i32>} : memref<2x2048xf32, #tpu.memory_space<vmem>>, vector<1x64xf32>,
    %216 = vector.extract_strided_slice %213 {offsets = [0, 64], sizes = [1, 64], strides = [1, 1]} : vector<1x128xf32> to vector<1x64xf32>
    %c1_112 = arith.constant 1 : index
    %c1024_113 = arith.constant 1024 : index
    %217 = vector.load %arg12[%c1_112, %c1024_113] : memref<2x2048xf32, #tpu.memory_space<vmem>>, vector<1x64xf32>
    tpu.vector_store %arg12[%c1_112, %c1024_113], %216 {strides = array<i32>} : memref<2x2048xf32, #tpu.memory_space<vmem>>, vector<1x64xf32>,
    %218 = vector.extract_strided_slice %132 {offsets = [17, 0], sizes = [1, 128], strides = [1, 1]} : vector<32x128xf32> to vector<1x128xf32>
    %219 = vector.extract_strided_slice %218 {offsets = [0, 0], sizes = [1, 64], strides = [1, 1]} : vector<1x128xf32> to vector<1x64xf32>
    %c0_114 = arith.constant 0 : index
    %c1088 = arith.constant 1088 : index
    %220 = vector.load %arg12[%c0_114, %c1088] : memref<2x2048xf32, #tpu.memory_space<vmem>>, vector<1x64xf32>
    tpu.vector_store %arg12[%c0_114, %c1088], %219 {strides = array<i32>} : memref<2x2048xf32, #tpu.memory_space<vmem>>, vector<1x64xf32>,
    %221 = vector.extract_strided_slice %218 {offsets = [0, 64], sizes = [1, 64], strides = [1, 1]} : vector<1x128xf32> to vector<1x64xf32>
    %c1_115 = arith.constant 1 : index
    %c1088_116 = arith.constant 1088 : index
    %222 = vector.load %arg12[%c1_115, %c1088_116] : memref<2x2048xf32, #tpu.memory_space<vmem>>, vector<1x64xf32>
    tpu.vector_store %arg12[%c1_115, %c1088_116], %221 {strides = array<i32>} : memref<2x2048xf32, #tpu.memory_space<vmem>>, vector<1x64xf32>,
    %223 = vector.extract_strided_slice %132 {offsets = [18, 0], sizes = [1, 128], strides = [1, 1]} : vector<32x128xf32> to vector<1x128xf32>
    %224 = vector.extract_strided_slice %223 {offsets = [0, 0], sizes = [1, 64], strides = [1, 1]} : vector<1x128xf32> to vector<1x64xf32>
    %c0_117 = arith.constant 0 : index
    %c1152 = arith.constant 1152 : index
    %225 = vector.load %arg12[%c0_117, %c1152] : memref<2x2048xf32, #tpu.memory_space<vmem>>, vector<1x64xf32>
    tpu.vector_store %arg12[%c0_117, %c1152], %224 {strides = array<i32>} : memref<2x2048xf32, #tpu.memory_space<vmem>>, vector<1x64xf32>,
    %226 = vector.extract_strided_slice %223 {offsets = [0, 64], sizes = [1, 64], strides = [1, 1]} : vector<1x128xf32> to vector<1x64xf32>
    %c1_118 = arith.constant 1 : index
    %c1152_119 = arith.constant 1152 : index
    %227 = vector.load %arg12[%c1_118, %c1152_119] : memref<2x2048xf32, #tpu.memory_space<vmem>>, vector<1x64xf32>
    tpu.vector_store %arg12[%c1_118, %c1152_119], %226 {strides = array<i32>} : memref<2x2048xf32, #tpu.memory_space<vmem>>, vector<1x64xf32>,
    %228 = vector.extract_strided_slice %132 {offsets = [19, 0], sizes = [1, 128], strides = [1, 1]} : vector<32x128xf32> to vector<1x128xf32>
    %229 = vector.extract_strided_slice %228 {offsets = [0, 0], sizes = [1, 64], strides = [1, 1]} : vector<1x128xf32> to vector<1x64xf32>
    %c0_120 = arith.constant 0 : index
    %c1216 = arith.constant 1216 : index
    %230 = vector.load %arg12[%c0_120, %c1216] : memref<2x2048xf32, #tpu.memory_space<vmem>>, vector<1x64xf32>
    tpu.vector_store %arg12[%c0_120, %c1216], %229 {strides = array<i32>} : memref<2x2048xf32, #tpu.memory_space<vmem>>, vector<1x64xf32>,
    %231 = vector.extract_strided_slice %228 {offsets = [0, 64], sizes = [1, 64], strides = [1, 1]} : vector<1x128xf32> to vector<1x64xf32>
    %c1_121 = arith.constant 1 : index
    %c1216_122 = arith.constant 1216 : index
    %232 = vector.load %arg12[%c1_121, %c1216_122] : memref<2x2048xf32, #tpu.memory_space<vmem>>, vector<1x64xf32>
    tpu.vector_store %arg12[%c1_121, %c1216_122], %231 {strides = array<i32>} : memref<2x2048xf32, #tpu.memory_space<vmem>>, vector<1x64xf32>,
    %233 = vector.extract_strided_slice %132 {offsets = [20, 0], sizes = [1, 128], strides = [1, 1]} : vector<32x128xf32> to vector<1x128xf32>
    %234 = vector.extract_strided_slice %233 {offsets = [0, 0], sizes = [1, 64], strides = [1, 1]} : vector<1x128xf32> to vector<1x64xf32>
    %c0_123 = arith.constant 0 : index
    %c1280 = arith.constant 1280 : index
    %235 = vector.load %arg12[%c0_123, %c1280] : memref<2x2048xf32, #tpu.memory_space<vmem>>, vector<1x64xf32>
    tpu.vector_store %arg12[%c0_123, %c1280], %234 {strides = array<i32>} : memref<2x2048xf32, #tpu.memory_space<vmem>>, vector<1x64xf32>,
    %236 = vector.extract_strided_slice %233 {offsets = [0, 64], sizes = [1, 64], strides = [1, 1]} : vector<1x128xf32> to vector<1x64xf32>
    %c1_124 = arith.constant 1 : index
    %c1280_125 = arith.constant 1280 : index
    %237 = vector.load %arg12[%c1_124, %c1280_125] : memref<2x2048xf32, #tpu.memory_space<vmem>>, vector<1x64xf32>
    tpu.vector_store %arg12[%c1_124, %c1280_125], %236 {strides = array<i32>} : memref<2x2048xf32, #tpu.memory_space<vmem>>, vector<1x64xf32>,
    %238 = vector.extract_strided_slice %132 {offsets = [21, 0], sizes = [1, 128], strides = [1, 1]} : vector<32x128xf32> to vector<1x128xf32>
    %239 = vector.extract_strided_slice %238 {offsets = [0, 0], sizes = [1, 64], strides = [1, 1]} : vector<1x128xf32> to vector<1x64xf32>
    %c0_126 = arith.constant 0 : index
    %c1344 = arith.constant 1344 : index
    %240 = vector.load %arg12[%c0_126, %c1344] : memref<2x2048xf32, #tpu.memory_space<vmem>>, vector<1x64xf32>
    tpu.vector_store %arg12[%c0_126, %c1344], %239 {strides = array<i32>} : memref<2x2048xf32, #tpu.memory_space<vmem>>, vector<1x64xf32>,
    %241 = vector.extract_strided_slice %238 {offsets = [0, 64], sizes = [1, 64], strides = [1, 1]} : vector<1x128xf32> to vector<1x64xf32>
    %c1_127 = arith.constant 1 : index
    %c1344_128 = arith.constant 1344 : index
    %242 = vector.load %arg12[%c1_127, %c1344_128] : memref<2x2048xf32, #tpu.memory_space<vmem>>, vector<1x64xf32>
    tpu.vector_store %arg12[%c1_127, %c1344_128], %241 {strides = array<i32>} : memref<2x2048xf32, #tpu.memory_space<vmem>>, vector<1x64xf32>,
    %243 = vector.extract_strided_slice %132 {offsets = [22, 0], sizes = [1, 128], strides = [1, 1]} : vector<32x128xf32> to vector<1x128xf32>
    %244 = vector.extract_strided_slice %243 {offsets = [0, 0], sizes = [1, 64], strides = [1, 1]} : vector<1x128xf32> to vector<1x64xf32>
    %c0_129 = arith.constant 0 : index
    %c1408 = arith.constant 1408 : index
    %245 = vector.load %arg12[%c0_129, %c1408] : memref<2x2048xf32, #tpu.memory_space<vmem>>, vector<1x64xf32>
    tpu.vector_store %arg12[%c0_129, %c1408], %244 {strides = array<i32>} : memref<2x2048xf32, #tpu.memory_space<vmem>>, vector<1x64xf32>,
    %246 = vector.extract_strided_slice %243 {offsets = [0, 64], sizes = [1, 64], strides = [1, 1]} : vector<1x128xf32> to vector<1x64xf32>
    %c1_130 = arith.constant 1 : index
    %c1408_131 = arith.constant 1408 : index
    %247 = vector.load %arg12[%c1_130, %c1408_131] : memref<2x2048xf32, #tpu.memory_space<vmem>>, vector<1x64xf32>
    tpu.vector_store %arg12[%c1_130, %c1408_131], %246 {strides = array<i32>} : memref<2x2048xf32, #tpu.memory_space<vmem>>, vector<1x64xf32>,
    %248 = vector.extract_strided_slice %132 {offsets = [23, 0], sizes = [1, 128], strides = [1, 1]} : vector<32x128xf32> to vector<1x128xf32>
    %249 = vector.extract_strided_slice %248 {offsets = [0, 0], sizes = [1, 64], strides = [1, 1]} : vector<1x128xf32> to vector<1x64xf32>
    %c0_132 = arith.constant 0 : index
    %c1472 = arith.constant 1472 : index
    %250 = vector.load %arg12[%c0_132, %c1472] : memref<2x2048xf32, #tpu.memory_space<vmem>>, vector<1x64xf32>
    tpu.vector_store %arg12[%c0_132, %c1472], %249 {strides = array<i32>} : memref<2x2048xf32, #tpu.memory_space<vmem>>, vector<1x64xf32>,
    %251 = vector.extract_strided_slice %248 {offsets = [0, 64], sizes = [1, 64], strides = [1, 1]} : vector<1x128xf32> to vector<1x64xf32>
    %c1_133 = arith.constant 1 : index
    %c1472_134 = arith.constant 1472 : index
    %252 = vector.load %arg12[%c1_133, %c1472_134] : memref<2x2048xf32, #tpu.memory_space<vmem>>, vector<1x64xf32>
    tpu.vector_store %arg12[%c1_133, %c1472_134], %251 {strides = array<i32>} : memref<2x2048xf32, #tpu.memory_space<vmem>>, vector<1x64xf32>,
    %253 = vector.extract_strided_slice %132 {offsets = [24, 0], sizes = [1, 128], strides = [1, 1]} : vector<32x128xf32> to vector<1x128xf32>
    %254 = vector.extract_strided_slice %253 {offsets = [0, 0], sizes = [1, 64], strides = [1, 1]} : vector<1x128xf32> to vector<1x64xf32>
    %c0_135 = arith.constant 0 : index
    %c1536 = arith.constant 1536 : index
    %255 = vector.load %arg12[%c0_135, %c1536] : memref<2x2048xf32, #tpu.memory_space<vmem>>, vector<1x64xf32>
    tpu.vector_store %arg12[%c0_135, %c1536], %254 {strides = array<i32>} : memref<2x2048xf32, #tpu.memory_space<vmem>>, vector<1x64xf32>,
    %256 = vector.extract_strided_slice %253 {offsets = [0, 64], sizes = [1, 64], strides = [1, 1]} : vector<1x128xf32> to vector<1x64xf32>
    %c1_136 = arith.constant 1 : index
    %c1536_137 = arith.constant 1536 : index
    %257 = vector.load %arg12[%c1_136, %c1536_137] : memref<2x2048xf32, #tpu.memory_space<vmem>>, vector<1x64xf32>
    tpu.vector_store %arg12[%c1_136, %c1536_137], %256 {strides = array<i32>} : memref<2x2048xf32, #tpu.memory_space<vmem>>, vector<1x64xf32>,
    %258 = vector.extract_strided_slice %132 {offsets = [25, 0], sizes = [1, 128], strides = [1, 1]} : vector<32x128xf32> to vector<1x128xf32>
    %259 = vector.extract_strided_slice %258 {offsets = [0, 0], sizes = [1, 64], strides = [1, 1]} : vector<1x128xf32> to vector<1x64xf32>
    %c0_138 = arith.constant 0 : index
    %c1600 = arith.constant 1600 : index
    %260 = vector.load %arg12[%c0_138, %c1600] : memref<2x2048xf32, #tpu.memory_space<vmem>>, vector<1x64xf32>
    tpu.vector_store %arg12[%c0_138, %c1600], %259 {strides = array<i32>} : memref<2x2048xf32, #tpu.memory_space<vmem>>, vector<1x64xf32>,
    %261 = vector.extract_strided_slice %258 {offsets = [0, 64], sizes = [1, 64], strides = [1, 1]} : vector<1x128xf32> to vector<1x64xf32>
    %c1_139 = arith.constant 1 : index
    %c1600_140 = arith.constant 1600 : index
    %262 = vector.load %arg12[%c1_139, %c1600_140] : memref<2x2048xf32, #tpu.memory_space<vmem>>, vector<1x64xf32>
    tpu.vector_store %arg12[%c1_139, %c1600_140], %261 {strides = array<i32>} : memref<2x2048xf32, #tpu.memory_space<vmem>>, vector<1x64xf32>,
    %263 = vector.extract_strided_slice %132 {offsets = [26, 0], sizes = [1, 128], strides = [1, 1]} : vector<32x128xf32> to vector<1x128xf32>
    %264 = vector.extract_strided_slice %263 {offsets = [0, 0], sizes = [1, 64], strides = [1, 1]} : vector<1x128xf32> to vector<1x64xf32>
    %c0_141 = arith.constant 0 : index
    %c1664 = arith.constant 1664 : index
    %265 = vector.load %arg12[%c0_141, %c1664] : memref<2x2048xf32, #tpu.memory_space<vmem>>, vector<1x64xf32>
    tpu.vector_store %arg12[%c0_141, %c1664], %264 {strides = array<i32>} : memref<2x2048xf32, #tpu.memory_space<vmem>>, vector<1x64xf32>,
    %266 = vector.extract_strided_slice %263 {offsets = [0, 64], sizes = [1, 64], strides = [1, 1]} : vector<1x128xf32> to vector<1x64xf32>
    %c1_142 = arith.constant 1 : index
    %c1664_143 = arith.constant 1664 : index
    %267 = vector.load %arg12[%c1_142, %c1664_143] : memref<2x2048xf32, #tpu.memory_space<vmem>>, vector<1x64xf32>
    tpu.vector_store %arg12[%c1_142, %c1664_143], %266 {strides = array<i32>} : memref<2x2048xf32, #tpu.memory_space<vmem>>, vector<1x64xf32>,
    %268 = vector.extract_strided_slice %132 {offsets = [27, 0], sizes = [1, 128], strides = [1, 1]} : vector<32x128xf32> to vector<1x128xf32>
    %269 = vector.extract_strided_slice %268 {offsets = [0, 0], sizes = [1, 64], strides = [1, 1]} : vector<1x128xf32> to vector<1x64xf32>
    %c0_144 = arith.constant 0 : index
    %c1728 = arith.constant 1728 : index
    %270 = vector.load %arg12[%c0_144, %c1728] : memref<2x2048xf32, #tpu.memory_space<vmem>>, vector<1x64xf32>
    tpu.vector_store %arg12[%c0_144, %c1728], %269 {strides = array<i32>} : memref<2x2048xf32, #tpu.memory_space<vmem>>, vector<1x64xf32>,
    %271 = vector.extract_strided_slice %268 {offsets = [0, 64], sizes = [1, 64], strides = [1, 1]} : vector<1x128xf32> to vector<1x64xf32>
    %c1_145 = arith.constant 1 : index
    %c1728_146 = arith.constant 1728 : index
    %272 = vector.load %arg12[%c1_145, %c1728_146] : memref<2x2048xf32, #tpu.memory_space<vmem>>, vector<1x64xf32>
    tpu.vector_store %arg12[%c1_145, %c1728_146], %271 {strides = array<i32>} : memref<2x2048xf32, #tpu.memory_space<vmem>>, vector<1x64xf32>,
    %273 = vector.extract_strided_slice %132 {offsets = [28, 0], sizes = [1, 128], strides = [1, 1]} : vector<32x128xf32> to vector<1x128xf32>
    %274 = vector.extract_strided_slice %273 {offsets = [0, 0], sizes = [1, 64], strides = [1, 1]} : vector<1x128xf32> to vector<1x64xf32>
    %c0_147 = arith.constant 0 : index
    %c1792 = arith.constant 1792 : index
    %275 = vector.load %arg12[%c0_147, %c1792] : memref<2x2048xf32, #tpu.memory_space<vmem>>, vector<1x64xf32>
    tpu.vector_store %arg12[%c0_147, %c1792], %274 {strides = array<i32>} : memref<2x2048xf32, #tpu.memory_space<vmem>>, vector<1x64xf32>,
    %276 = vector.extract_strided_slice %273 {offsets = [0, 64], sizes = [1, 64], strides = [1, 1]} : vector<1x128xf32> to vector<1x64xf32>
    %c1_148 = arith.constant 1 : index
    %c1792_149 = arith.constant 1792 : index
    %277 = vector.load %arg12[%c1_148, %c1792_149] : memref<2x2048xf32, #tpu.memory_space<vmem>>, vector<1x64xf32>
    tpu.vector_store %arg12[%c1_148, %c1792_149], %276 {strides = array<i32>} : memref<2x2048xf32, #tpu.memory_space<vmem>>, vector<1x64xf32>,
    %278 = vector.extract_strided_slice %132 {offsets = [29, 0], sizes = [1, 128], strides = [1, 1]} : vector<32x128xf32> to vector<1x128xf32>
    %279 = vector.extract_strided_slice %278 {offsets = [0, 0], sizes = [1, 64], strides = [1, 1]} : vector<1x128xf32> to vector<1x64xf32>
    %c0_150 = arith.constant 0 : index
    %c1856 = arith.constant 1856 : index
    %280 = vector.load %arg12[%c0_150, %c1856] : memref<2x2048xf32, #tpu.memory_space<vmem>>, vector<1x64xf32>
    tpu.vector_store %arg12[%c0_150, %c1856], %279 {strides = array<i32>} : memref<2x2048xf32, #tpu.memory_space<vmem>>, vector<1x64xf32>,
    %281 = vector.extract_strided_slice %278 {offsets = [0, 64], sizes = [1, 64], strides = [1, 1]} : vector<1x128xf32> to vector<1x64xf32>
    %c1_151 = arith.constant 1 : index
    %c1856_152 = arith.constant 1856 : index
    %282 = vector.load %arg12[%c1_151, %c1856_152] : memref<2x2048xf32, #tpu.memory_space<vmem>>, vector<1x64xf32>
    tpu.vector_store %arg12[%c1_151, %c1856_152], %281 {strides = array<i32>} : memref<2x2048xf32, #tpu.memory_space<vmem>>, vector<1x64xf32>,
    %283 = vector.extract_strided_slice %132 {offsets = [30, 0], sizes = [1, 128], strides = [1, 1]} : vector<32x128xf32> to vector<1x128xf32>
    %284 = vector.extract_strided_slice %283 {offsets = [0, 0], sizes = [1, 64], strides = [1, 1]} : vector<1x128xf32> to vector<1x64xf32>
    %c0_153 = arith.constant 0 : index
    %c1920 = arith.constant 1920 : index
    %285 = vector.load %arg12[%c0_153, %c1920] : memref<2x2048xf32, #tpu.memory_space<vmem>>, vector<1x64xf32>
    tpu.vector_store %arg12[%c0_153, %c1920], %284 {strides = array<i32>} : memref<2x2048xf32, #tpu.memory_space<vmem>>, vector<1x64xf32>,
    %286 = vector.extract_strided_slice %283 {offsets = [0, 64], sizes = [1, 64], strides = [1, 1]} : vector<1x128xf32> to vector<1x64xf32>
    %c1_154 = arith.constant 1 : index
    %c1920_155 = arith.constant 1920 : index
    %287 = vector.load %arg12[%c1_154, %c1920_155] : memref<2x2048xf32, #tpu.memory_space<vmem>>, vector<1x64xf32>
    tpu.vector_store %arg12[%c1_154, %c1920_155], %286 {strides = array<i32>} : memref<2x2048xf32, #tpu.memory_space<vmem>>, vector<1x64xf32>,
    %288 = vector.extract_strided_slice %132 {offsets = [31, 0], sizes = [1, 128], strides = [1, 1]} : vector<32x128xf32> to vector<1x128xf32>
    %289 = vector.extract_strided_slice %288 {offsets = [0, 0], sizes = [1, 64], strides = [1, 1]} : vector<1x128xf32> to vector<1x64xf32>
    %c0_156 = arith.constant 0 : index
    %c1984 = arith.constant 1984 : index
    %290 = vector.load %arg12[%c0_156, %c1984] : memref<2x2048xf32, #tpu.memory_space<vmem>>, vector<1x64xf32>
    tpu.vector_store %arg12[%c0_156, %c1984], %289 {strides = array<i32>} : memref<2x2048xf32, #tpu.memory_space<vmem>>, vector<1x64xf32>,
    %291 = vector.extract_strided_slice %288 {offsets = [0, 64], sizes = [1, 64], strides = [1, 1]} : vector<1x128xf32> to vector<1x64xf32>
    %c1_157 = arith.constant 1 : index
    %c1984_158 = arith.constant 1984 : index
    %292 = vector.load %arg12[%c1_157, %c1984_158] : memref<2x2048xf32, #tpu.memory_space<vmem>>, vector<1x64xf32>
    tpu.vector_store %arg12[%c1_157, %c1984_158], %291 {strides = array<i32>} : memref<2x2048xf32, #tpu.memory_space<vmem>>, vector<1x64xf32>,
    %c0_159 = arith.constant 0 : index
    %c0_160 = arith.constant 0 : index
    %293 = vector.load %arg12[%c0_159, %c0_160] : memref<2x2048xf32, #tpu.memory_space<vmem>>, vector<2x2048xf32>
    %c0_161 = arith.constant 0 : index
    %c0_162 = arith.constant 0 : index
    %294 = vector.load %arg9[%c0_161, %c0_162] : memref<8x2048xf32, #tpu.memory_space<vmem>>, vector<8x2048xf32>
    %cst_163 = arith.constant dense<0.000000e+00> : vector<2x8xf32>
    %295 = tpu.matmul %293, %294, %cst_163 {dimension_numbers = #tpu.dot_dimension_numbers<[1], [1], [0], [0], [0, 0, 1, 0], [], []>} : vector<2x2048xf32>, vector<8x2048xf32>, vector<2x8xf32> -> vector<2x8xf32>
    %c0_164 = arith.constant 0 : index
    %c0_165 = arith.constant 0 : index
    %296 = vector.load %arg10[%c0_164, %c0_165] : memref<1x8xf32, #tpu.memory_space<vmem>>, vector<1x8xf32>
    %297 = vector.broadcast %296 : vector<1x8xf32> to vector<2x8xf32>
    %298 = arith.addf %295, %297 : vector<2x8xf32>
    %299 = vector.extract_strided_slice %298 {offsets = [0, 0], sizes = [2, 4], strides = [1, 1]} : vector<2x8xf32> to vector<2x4xf32>
    %300 = vector.extract_strided_slice %298 {offsets = [0, 4], sizes = [2, 1], strides = [1, 1]} : vector<2x8xf32> to vector<2x1xf32>
    %301 = vector.shape_cast %299 : vector<2x4xf32> to vector<1x2x4xf32>
    %cst_166 = arith.constant dense<0.000000e+00> : vector<1xf32>
    %302 = vector.multi_reduction <add>, %301, %cst_166 [1, 2] : vector<1x2x4xf32> to vector<1xf32>
    %303 = vector.shape_cast %302 : vector<1xf32> to vector<1x1x1xf32>
    %304 = vector.extract %303[0, 0, 0] : f32 from vector<1x1x1xf32>
    %cst_167 = arith.constant 8.000000e+00 : f32
    %305 = arith.divf %304, %cst_167 : f32
    %306 = vector.broadcast %305 : f32 to vector<2x4xf32>
    %307 = arith.subf %299, %306 : vector<2x4xf32>
    %308 = vector.broadcast %300 : vector<2x1xf32> to vector<2x4xf32>
    %309 = arith.addf %308, %307 : vector<2x4xf32>
    %c0_168 = arith.constant 0 : index
    %c0_169 = arith.constant 0 : index
    %310 = vector.load %arg11[%c0_168, %c0_169] : memref<2x4xf32, #tpu.memory_space<vmem>>, vector<2x4xf32>
    tpu.vector_store %arg11[%c0_168, %c0_169], %309 {strides = array<i32>} : memref<2x4xf32, #tpu.memory_space<vmem>>, vector<2x4xf32>,
    return
  }
  func.func @transform_0(%arg0: i32) -> (i32, i32) {
    %c0_i32 = arith.constant 0 : i32
    %c0_i32_0 = arith.constant 0 : i32
    %c0_i32_1 = arith.constant 0 : i32
    return %c0_i32, %c0_i32_0 : i32, i32
  }
  func.func @transform_1(%arg0: i32) -> (i32, i32) {
    %c0_i32 = arith.constant 0 : i32
    %c0_i32_0 = arith.constant 0 : i32
    %c0_i32_1 = arith.constant 0 : i32
    return %c0_i32, %c0_i32_0 : i32, i32
  }
  func.func @transform_2(%arg0: i32) -> (i32, i32) {
    %c0_i32 = arith.constant 0 : i32
    %c0_i32_0 = arith.constant 0 : i32
    %c0_i32_1 = arith.constant 0 : i32
    return %c0_i32, %c0_i32_0 : i32, i32
  }
  func.func @transform_3(%arg0: i32) -> (i32, i32) {
    %c0_i32 = arith.constant 0 : i32
    %c0_i32_0 = arith.constant 0 : i32
    %c0_i32_1 = arith.constant 0 : i32
    return %c0_i32, %c0_i32_0 : i32, i32
  }
  func.func @transform_4(%arg0: i32) -> (i32, i32) {
    %c0_i32 = arith.constant 0 : i32
    %c0_i32_0 = arith.constant 0 : i32
    %c0_i32_1 = arith.constant 0 : i32
    return %c0_i32, %c0_i32_0 : i32, i32
  }
  func.func @transform_5(%arg0: i32) -> (i32, i32) {
    %c0_i32 = arith.constant 0 : i32
    %c0_i32_0 = arith.constant 0 : i32
    %c0_i32_1 = arith.constant 0 : i32
    return %c0_i32, %c0_i32_0 : i32, i32
  }
  func.func @transform_6(%arg0: i32) -> (i32, i32) {
    %c0_i32 = arith.constant 0 : i32
    %c0_i32_0 = arith.constant 0 : i32
    %c0_i32_1 = arith.constant 0 : i32
    return %c0_i32, %c0_i32_0 : i32, i32
  }
  func.func @transform_7(%arg0: i32) -> (i32, i32) {
    %c0_i32 = arith.constant 0 : i32
    %c0_i32_0 = arith.constant 0 : i32
    %c0_i32_1 = arith.constant 0 : i32
    return %c0_i32, %c0_i32_0 : i32, i32
  }
  func.func @transform_8(%arg0: i32) -> (i32, i32) {
    %c0_i32 = arith.constant 0 : i32
    %c0_i32_0 = arith.constant 0 : i32
    %c0_i32_1 = arith.constant 0 : i32
    return %c0_i32, %c0_i32_0 : i32, i32
  }
  func.func @transform_9(%arg0: i32) -> (i32, i32) {
    %c0_i32 = arith.constant 0 : i32
    %c0_i32_0 = arith.constant 0 : i32
    %c0_i32_1 = arith.constant 0 : i32
    return %c0_i32, %c0_i32_0 : i32, i32
  }
  func.func @transform_10(%arg0: i32) -> (i32, i32) {
    %c0_i32 = arith.constant 0 : i32
    %c0_i32_0 = arith.constant 0 : i32
    %c0_i32_1 = arith.constant 0 : i32
    return %c0_i32, %c0_i32_0 : i32, i32
  }
}

</mosaic_0001>

<llo_original>
// kernel: intrinsic_model_forward.1
$region0: #{intrinsic_model_forward.1}
  #allocation0 [shape = 'u32[]', space=smem, size = 0x4, offset = 0x4, fixed_abs, tag = 'smem constant byte address 0x4 - core index']
  #allocation1 [shape = 'u32[72,128]{1,0:T(1,128)}', space=vmem, size = 0x9000, scoped, tag = 'internal scratch']
  #allocation2 [shape = 'f32[2,2048]{1,0:T(2,128)}', space=vmem, size = 0x4000, scoped, tag = 'scratch operand']
  %s0 = inlined_call_operand.vmem [shape: f32[9,128], index: 0, kind: input, shape index: {}]
  %s1 = inlined_call_operand.vmem [shape: f32[8,128], index: 1, kind: input, shape index: {}]
  %s2 = inlined_call_operand.hbm [shape: f32[16,72], index: 2, kind: input, shape index: {}]
  %s3 = inlined_call_operand.vmem [shape: f32[16,1], index: 3, kind: input, shape index: {}]
  %s4 = inlined_call_operand.hbm [shape: f32[32,144], index: 4, kind: input, shape index: {}]
  %s5 = inlined_call_operand.vmem [shape: f32[32,1], index: 5, kind: input, shape index: {}]
  %s6 = inlined_call_operand.vmem [shape: f32[32,288], index: 6, kind: input, shape index: {}]
  %s7 = inlined_call_operand.vmem [shape: f32[32,1], index: 7, kind: input, shape index: {}]
  %s8 = inlined_call_operand.hbm [shape: f32[8,2048], index: 8, kind: input, shape index: {}]
  %s9 = inlined_call_operand.vmem [shape: f32[1,8], index: 9, kind: input, shape index: {}]
  %s10 = inlined_call_operand.hbm [shape: f32[2,4], index: 10, kind: output, shape index: {}]
  %s11 = sld [smem:[#allocation0]]
  $region62: #{intrinsic_model_forward.1} parent=0
    _
  %s13 = ssub.s32 1, %s11
  %s14 = scalar_select 0, %s13, %s11
  $region1: #{intrinsic_model_forward.1} parent=0
    #allocation3 [shape = 'u8[8192]{0}', space=vmem, size = 0x2000, scoped, tag = 'input window, operand 2, single buffered']
    #allocation4 [shape = 's32[1]{0}', space=sflag, size = 0x4, scoped, tag = 'scoped memory for intrinsic_model_forward.1']
    #allocation5 [shape = 's32[1]{0}', space=sflag, size = 0x4, scoped, tag = 'scoped memory for intrinsic_model_forward.1']
    #allocation6 [shape = 'u8[32768]{0}', space=vmem, size = 0x8000, scoped, tag = 'input window, operand 4, single buffered']
    #allocation7 [shape = 's32[1]{0}', space=sflag, size = 0x4, scoped, tag = 'scoped memory for intrinsic_model_forward.1']
    #allocation8 [shape = 'u8[65536]{0}', space=vmem, size = 0x10000, scoped, tag = 'input window, operand 8, single buffered']
    #allocation9 [shape = 'u8[1024]{0}', space=vmem, size = 0x400, scoped, tag = 'output window, operand 0, single buffered']
    %15 = vsyncpa [#allocation4], 0
    %16 = vsyncpa [#allocation7], 0
    %17 = vsyncpa [#allocation5], 0
    // Predicated region
    $region2: #{intrinsic_model_forward.1} parent=1 // pred_check
      _
    $region3: #{intrinsic_model_forward.1} parent=1 // pred_check_branch
      %19 = sbr.rel (0) target = $region5
    $region4: #{intrinsic_model_forward.1} parent=1 // pred_region
      _
    $region5: #{intrinsic_model_forward.1} parent=1 // pred_fallthru
      _
    // Predicated region
    $region6: #{intrinsic_model_forward.1} parent=1 // pred_check
      _
    $region7: #{intrinsic_model_forward.1} parent=1 // pred_check_branch
      %21 = sbr.rel (0) target = $region9
    $region8: #{intrinsic_model_forward.1} parent=1 // pred_region
      _
    $region9: #{intrinsic_model_forward.1} parent=1 // pred_fallthru
      _
    // Predicated region
    $region10: #{intrinsic_model_forward.1} parent=1 // pred_check
      _
    $region11: #{intrinsic_model_forward.1} parent=1 // pred_check_branch
      %23 = sbr.rel (0) target = $region13
    $region12: #{intrinsic_model_forward.1} parent=1 // pred_region
      %25 = vsyncadd [#allocation4], 0
      %s26 = sshll.u32 %s2, 4
      %s27 = int_to_ptr.hbm [resolvable:$true] %s26
      %s28 = sshll.u32 [#allocation3], 4
      %s29 = int_to_ptr.vmem [resolvable:$true] %s28
      %34 = dma.hbm_to_vmem [thread:$0]  %s27, 256, %s29, [#allocation4], 128, 128, 8
    $region13: #{intrinsic_model_forward.1} parent=1 // pred_fallthru
      _
    // Predicated region
    $region14: #{intrinsic_model_forward.1} parent=1 // pred_check
      _
    $region15: #{intrinsic_model_forward.1} parent=1 // pred_check_branch
      %36 = sbr.rel (0) target = $region17
    $region16: #{intrinsic_model_forward.1} parent=1 // pred_region
      _
    $region17: #{intrinsic_model_forward.1} parent=1 // pred_fallthru
      _
    // Predicated region
    $region18: #{intrinsic_model_forward.1} parent=1 // pred_check
      _
    $region19: #{intrinsic_model_forward.1} parent=1 // pred_check_branch
      %38 = sbr.rel (0) target = $region21
    $region20: #{intrinsic_model_forward.1} parent=1 // pred_region
      %40 = vsyncadd [#allocation7], 0
      %s41 = sshll.u32 %s4, 4
      %s42 = int_to_ptr.hbm [resolvable:$true] %s41
      %s43 = sshll.u32 [#allocation6], 4
      %s44 = int_to_ptr.vmem [resolvable:$true] %s43
      %49 = dma.hbm_to_vmem [thread:$0]  %s42, 1024, %s44, [#allocation7], 256, 256, 16
    $region21: #{intrinsic_model_forward.1} parent=1 // pred_fallthru
      _
    // Predicated region
    $region22: #{intrinsic_model_forward.1} parent=1 // pred_check
      _
    $region23: #{intrinsic_model_forward.1} parent=1 // pred_check_branch
      %51 = sbr.rel (0) target = $region25
    $region24: #{intrinsic_model_forward.1} parent=1 // pred_region
      _
    $region25: #{intrinsic_model_forward.1} parent=1 // pred_fallthru
      _
    // Predicated region
    $region26: #{intrinsic_model_forward.1} parent=1 // pred_check
      _
    $region27: #{intrinsic_model_forward.1} parent=1 // pred_check_branch
      %53 = sbr.rel (0) target = $region29
    $region28: #{intrinsic_model_forward.1} parent=1 // pred_region
      _
    $region29: #{intrinsic_model_forward.1} parent=1 // pred_fallthru
      _
    // Predicated region
    $region30: #{intrinsic_model_forward.1} parent=1 // pred_check
      _
    $region31: #{intrinsic_model_forward.1} parent=1 // pred_check_branch
      %55 = sbr.rel (0) target = $region33
    $region32: #{intrinsic_model_forward.1} parent=1 // pred_region
      _
    $region33: #{intrinsic_model_forward.1} parent=1 // pred_fallthru
      _
    // Predicated region
    $region34: #{intrinsic_model_forward.1} parent=1 // pred_check
      _
    $region35: #{intrinsic_model_forward.1} parent=1 // pred_check_branch
      %57 = sbr.rel (0) target = $region37
    $region36: #{intrinsic_model_forward.1} parent=1 // pred_region
      %59 = vsyncadd [#allocation7], 0
      %s61 = sshll.u32 %s8, 4
      %s62 = int_to_ptr.hbm [resolvable:$true] %s61
      %s63 = sshll.u32 [#allocation8], 4
      %s64 = int_to_ptr.vmem [resolvable:$true] %s63
      %66 = dma.hbm_to_vmem [thread:$0]  %s62, 2048, %s64, [#allocation7]
    $region37: #{intrinsic_model_forward.1} parent=1 // pred_fallthru
      _
    // Predicated region
    $region38: #{intrinsic_model_forward.1} parent=1 // pred_check
      _
    $region39: #{intrinsic_model_forward.1} parent=1 // pred_check_branch
      %68 = sbr.rel (0) target = $region41
    $region40: #{intrinsic_model_forward.1} parent=1 // pred_region
      _
    $region41: #{intrinsic_model_forward.1} parent=1 // pred_fallthru
      _
    // Predicated region
    $region42: #{intrinsic_model_forward.1} parent=1 // pred_check
      _
    $region43: #{intrinsic_model_forward.1} parent=1 // pred_check_branch
      %70 = sbr.rel (0) target = $region45
    $region44: #{intrinsic_model_forward.1} parent=1 // pred_region
      %72 = dma.done [#allocation4], 256
    $region45: #{intrinsic_model_forward.1} parent=1 // pred_fallthru
      _
    // Predicated region
    $region46: #{intrinsic_model_forward.1} parent=1 // pred_check
      _
    $region47: #{intrinsic_model_forward.1} parent=1 // pred_check_branch
      %74 = sbr.rel (0) target = $region49
    $region48: #{intrinsic_model_forward.1} parent=1 // pred_region
      %76 = dma.done [#allocation7], 1024
    $region49: #{intrinsic_model_forward.1} parent=1 // pred_fallthru
      _
    // Predicated region
    $region50: #{intrinsic_model_forward.1} parent=1 // pred_check
      _
    $region51: #{intrinsic_model_forward.1} parent=1 // pred_check_branch
      %78 = sbr.rel (0) target = $region53
    $region52: #{intrinsic_model_forward.1} parent=1 // pred_region
      %80 = dma.done [#allocation7], 2048
    $region53: #{intrinsic_model_forward.1} parent=1 // pred_fallthru
      _
    %v81 = vld [vmem:[%s1] sm:$0xff]
    %v82 = vld [vmem:[%s0] sm:$0x1]
    %v83 = vperm.slane %v82, 0
    %85 = vrot.lane.b32.xlu0 %v83, 119
    %v86 = vpop.permute.xlu0 %85
    %v88 = vmul.f32 %v81, %v86
    %v89 = vld [vmem:[%s0 + $0x1] sm:$0x1]
    %v90 = vperm.slane %v89, 0
    %92 = vrot.lane.b32.xlu0 %v90, 120
    %v93 = vpop.permute.xlu0 %92
    %v95 = vmul.f32 %v81, %v93
    %v96 = vld [vmem:[%s0 + $0x2] sm:$0x1]
    %v97 = vperm.slane %v96, 0
    %99 = vrot.lane.b32.xlu0 %v97, 121
    %v100 = vpop.permute.xlu0 %99
    %v102 = vmul.f32 %v81, %v100
    %v103 = vld [vmem:[%s0 + $0x3] sm:$0x1]
    %v104 = vperm.slane %v103, 0
    %106 = vrot.lane.b32.xlu0 %v104, 127
    %v107 = vpop.permute.xlu0 %106
    %v109 = vmul.f32 %v81, %v107
    %v110 = vld [vmem:[%s0 + $0x5] sm:$0x1]
    %v111 = vperm.slane %v110, 0
    %113 = vrot.lane.b32.xlu0 %v111, 1
    %v114 = vpop.permute.xlu0 %113
    %v116 = vmul.f32 %v81, %v114
    %v117 = vld [vmem:[%s0 + $0x6] sm:$0x1]
    %v118 = vperm.slane %v117, 0
    %120 = vrot.lane.b32.xlu0 %v118, 7
    %v121 = vpop.permute.xlu0 %120
    %v123 = vmul.f32 %v81, %v121
    %v124 = vld [vmem:[%s0 + $0x7] sm:$0x1]
    %v125 = vperm.slane %v124, 0
    %127 = vrot.lane.b32.xlu0 %v125, 8
    %v128 = vpop.permute.xlu0 %127
    %v130 = vmul.f32 %v81, %v128
    %v131 = vld [vmem:[%s0 + $0x8] sm:$0x1]
    %v132 = vperm.slane %v131, 0
    %134 = vrot.lane.b32.xlu0 %v132, 9
    %v135 = vpop.permute.xlu0 %134
    %v137 = vmul.f32 %v81, %v135
    %139 = vrot.lane.b32.xlu0 %v95, 127
    %v140 = vpop.permute.xlu0 %139
    %142 = vrot.lane.b32.xlu0 %v102, 126
    %v143 = vpop.permute.xlu0 %142
    %145 = vrot.lane.b32.xlu0 %v109, 120
    %v146 = vpop.permute.xlu0 %145
    %148 = vrot.lane.b32.xlu0 %v81, 119
    %v149 = vpop.permute.xlu0 %148
    %151 = vrot.lane.b32.xlu0 %v116, 118
    %v152 = vpop.permute.xlu0 %151
    %154 = vrot.lane.b32.xlu0 %v123, 112
    %v155 = vpop.permute.xlu0 %154
    %157 = vrot.lane.b32.xlu0 %v130, 111
    %v158 = vpop.permute.xlu0 %157
    %160 = vrot.lane.b32.xlu0 %v137, 110
    %v161 = vpop.permute.xlu0 %160
    %v162 = vld [vmem:[#allocation3] sm:$0xff]
    %v163 = vld [vmem:[#allocation3 + $0x8] sm:$0xff]
    %v164 = vld [vmem:[%s3] sm:$0xff]
    %v165 = vld [vmem:[%s3 + $0x8] sm:$0xff]
    %167 = vset.pattern.permute.xlu0 0
    %168 = vperm.xlu0 %167, %v164
    %v169 = vpop.permute.xlu0 %168
    %172 = vset.pattern.permute.xlu0 0
    %173 = vperm.xlu0 %172, %v165
    %v174 = vpop.permute.xlu0 %173
    %177 = vrot.lane.b32.xlu0 %v88, 9
    %v178 = vpop.permute.xlu0 %177
    %179 = vrot.lane.b32.xlu0 %v140, 9
    %v180 = vpop.permute.xlu0 %179
    %181 = vrot.lane.b32.xlu0 %v143, 9
    %v182 = vpop.permute.xlu0 %181
    %183 = vrot.lane.b32.xlu0 %v146, 9
    %v184 = vpop.permute.xlu0 %183
    %185 = vrot.lane.b32.xlu0 %v149, 9
    %v186 = vpop.permute.xlu0 %185
    %187 = vrot.lane.b32.xlu0 %v152, 9
    %v188 = vpop.permute.xlu0 %187
    %189 = vrot.lane.b32.xlu0 %v155, 9
    %v190 = vpop.permute.xlu0 %189
    %191 = vrot.lane.b32.xlu0 %v158, 9
    %v192 = vpop.permute.xlu0 %191
    %193 = vrot.lane.b32.xlu0 %v161, 9
    %v194 = vpop.permute.xlu0 %193
    %vm195 = vcmask 72704
    %v196 = vsel %vm195, %v180, %v180
    %v197 = vsel %vm195, %v182, %v182
    %v198 = vsel %vm195, %v184, %v184
    %v199 = vsel %vm195, %v188, %v188
    %v200 = vsel %vm195, %v190, %v190
    %v201 = vsel %vm195, %v192, %v192
    %v202 = vsel %vm195, %v194, %v194
    %vm212 = vcmask 588800
    %v214 = vsel %vm212, %v162, 0
    %v217 = vsel %vm212, %v163, 0
    %219 = vmatpush.msra.mxu0 0.0
    %220 = vmatpush.msra.mxu0 0.0
    %221 = vmatpush.msra.mxu0 0.0
    %222 = vmatpush.msra.mxu0 0.0
    %223 = vmatpush.msra.mxu0 0.0
    %224 = vmatpush.msra.mxu0 0.0
    %225 = vmatpush.msra.mxu0 0.0
    %226 = vmatpush.msra.mxu0 %v202
    %227 = vmatpush.msra.mxu0 %v201
    %228 = vmatpush.msra.mxu0 %v200
    %229 = vmatpush.msra.mxu0 %v199
    %230 = vmatpush.msra.mxu0 %v186
    %231 = vmatpush.msra.mxu0 %v198
    %232 = vmatpush.msra.mxu0 %v197
    %233 = vmatpush.msra.mxu0 %v196
    %234 = vmatpush.msra.mxu0 %v178
    %235 = vmatmul.f32.gmra.mxu0 %v214
    %v236 = vpop.f32.mrf.mxu0
    %v237 = vadd.f32 %v169, %v236
    %238 = vmatmul.f32.gmra.mxu0 %v217
    %v239 = vpop.f32.mrf.mxu0
    %v240 = vadd.f32 %v174, %v239
    %241 = vdwg.mxu0
    %vm242 = vcmp.ge.f32.partialorder %v237, 0.0
    %vm243 = vcmp.ge.f32.partialorder %v240, 0.0
    %v244 = vmul.f32 %v237, 0.01
    %v245 = vmul.f32 %v240, 0.01
    %v246 = vsel %vm242, %v237, %v244
    %v247 = vsel %vm243, %v240, %v245
    %v248 = vmul.f32 %v246, %v86
    %v249 = vmul.f32 %v247, %v86
    %v250 = vmul.f32 %v246, %v93
    %v251 = vmul.f32 %v247, %v93
    %v252 = vmul.f32 %v246, %v100
    %v253 = vmul.f32 %v247, %v100
    %v254 = vmul.f32 %v246, %v107
    %v255 = vmul.f32 %v247, %v107
    %v256 = vmul.f32 %v246, %v114
    %v257 = vmul.f32 %v247, %v114
    %v258 = vmul.f32 %v246, %v121
    %v259 = vmul.f32 %v247, %v121
    %v260 = vmul.f32 %v246, %v128
    %v261 = vmul.f32 %v247, %v128
    %v262 = vmul.f32 %v246, %v135
    %v263 = vmul.f32 %v247, %v135
    %266 = vrot.lane.b32.xlu0 %v250, 127
    %v267 = vpop.permute.xlu0 %266
    %268 = vrot.lane.b32.xlu0 %v251, 127
    %v269 = vpop.permute.xlu0 %268
    %272 = vrot.lane.b32.xlu0 %v252, 126
    %v273 = vpop.permute.xlu0 %272
    %274 = vrot.lane.b32.xlu0 %v253, 126
    %v275 = vpop.permute.xlu0 %274
    %278 = vrot.lane.b32.xlu0 %v254, 120
    %v279 = vpop.permute.xlu0 %278
    %280 = vrot.lane.b32.xlu0 %v255, 120
    %v281 = vpop.permute.xlu0 %280
    %284 = vrot.lane.b32.xlu0 %v246, 119
    %v285 = vpop.permute.xlu0 %284
    %286 = vrot.lane.b32.xlu0 %v247, 119
    %v287 = vpop.permute.xlu0 %286
    %290 = vrot.lane.b32.xlu0 %v256, 118
    %v291 = vpop.permute.xlu0 %290
    %292 = vrot.lane.b32.xlu0 %v257, 118
    %v293 = vpop.permute.xlu0 %292
    %296 = vrot.lane.b32.xlu0 %v258, 112
    %v297 = vpop.permute.xlu0 %296
    %298 = vrot.lane.b32.xlu0 %v259, 112
    %v299 = vpop.permute.xlu0 %298
    %302 = vrot.lane.b32.xlu0 %v260, 111
    %v303 = vpop.permute.xlu0 %302
    %304 = vrot.lane.b32.xlu0 %v261, 111
    %v305 = vpop.permute.xlu0 %304
    %308 = vrot.lane.b32.xlu0 %v262, 110
    %v309 = vpop.permute.xlu0 %308
    %310 = vrot.lane.b32.xlu0 %v263, 110
    %v311 = vpop.permute.xlu0 %310
    %v312 = vld [vmem:[#allocation6] sm:$0xff]
    %v313 = vld [vmem:[#allocation6 + $0x8] sm:$0xff]
    %v314 = vld [vmem:[#allocation6 + $0x10] sm:$0xff]
    %v315 = vld [vmem:[#allocation6 + $0x18] sm:$0xff]
    %v316 = vld [vmem:[#allocation6 + $0x20] sm:$0xff]
    %v317 = vld [vmem:[#allocation6 + $0x28] sm:$0xff]
    %v318 = vld [vmem:[#allocation6 + $0x30] sm:$0xff]
    %v319 = vld [vmem:[#allocation6 + $0x38] sm:$0xff]
    %v320 = vld [vmem:[%s5] sm:$0xff]
    %v321 = vld [vmem:[%s5 + $0x8] sm:$0xff]
    %v322 = vld [vmem:[%s5 + $0x10] sm:$0xff]
    %v323 = vld [vmem:[%s5 + $0x18] sm:$0xff]
    %325 = vset.pattern.permute.xlu0 0
    %326 = vperm.xlu0 %325, %v320
    %v327 = vpop.permute.xlu0 %326
    %330 = vset.pattern.permute.xlu0 0
    %331 = vperm.xlu0 %330, %v321
    %v332 = vpop.permute.xlu0 %331
    %335 = vset.pattern.permute.xlu0 0
    %336 = vperm.xlu0 %335, %v322
    %v337 = vpop.permute.xlu0 %336
    %340 = vset.pattern.permute.xlu0 0
    %341 = vperm.xlu0 %340, %v323
    %v342 = vpop.permute.xlu0 %341
    %346 = vrot.lane.b32.xlu0 %v248, 9
    %v347 = vpop.permute.xlu0 %346
    %348 = vrot.lane.b32.xlu0 %v249, 9
    %v349 = vpop.permute.xlu0 %348
    %350 = vrot.lane.b32.xlu0 %v267, 9
    %v351 = vpop.permute.xlu0 %350
    %352 = vrot.lane.b32.xlu0 %v269, 9
    %v353 = vpop.permute.xlu0 %352
    %354 = vrot.lane.b32.xlu0 %v273, 9
    %v355 = vpop.permute.xlu0 %354
    %356 = vrot.lane.b32.xlu0 %v275, 9
    %v357 = vpop.permute.xlu0 %356
    %358 = vrot.lane.b32.xlu0 %v279, 9
    %v359 = vpop.permute.xlu0 %358
    %360 = vrot.lane.b32.xlu0 %v281, 9
    %v361 = vpop.permute.xlu0 %360
    %362 = vrot.lane.b32.xlu0 %v285, 9
    %v363 = vpop.permute.xlu0 %362
    %364 = vrot.lane.b32.xlu0 %v287, 9
    %v365 = vpop.permute.xlu0 %364
    %366 = vrot.lane.b32.xlu0 %v291, 9
    %v367 = vpop.permute.xlu0 %366
    %368 = vrot.lane.b32.xlu0 %v293, 9
    %v369 = vpop.permute.xlu0 %368
    %370 = vrot.lane.b32.xlu0 %v297, 9
    %v371 = vpop.permute.xlu0 %370
    %372 = vrot.lane.b32.xlu0 %v299, 9
    %v373 = vpop.permute.xlu0 %372
    %374 = vrot.lane.b32.xlu0 %v303, 9
    %v375 = vpop.permute.xlu0 %374
    %376 = vrot.lane.b32.xlu0 %v305, 9
    %v377 = vpop.permute.xlu0 %376
    %378 = vrot.lane.b32.xlu0 %v309, 9
    %v379 = vpop.permute.xlu0 %378
    %380 = vrot.lane.b32.xlu0 %v311, 9
    %v381 = vpop.permute.xlu0 %380
    %v382 = vsel %vm195, %v351, %v351
    %v383 = vsel %vm195, %v353, %v353
    %v384 = vsel %vm195, %v355, %v355
    %v385 = vsel %vm195, %v357, %v357
    %v386 = vsel %vm195, %v359, %v359
    %v387 = vsel %vm195, %v361, %v361
    %v388 = vsel %vm195, %v367, %v367
    %v389 = vsel %vm195, %v369, %v369
    %v390 = vsel %vm195, %v371, %v371
    %v391 = vsel %vm195, %v373, %v373
    %v392 = vsel %vm195, %v375, %v375
    %v393 = vsel %vm195, %v377, %v377
    %v394 = vsel %vm195, %v379, %v379
    %v395 = vsel %vm195, %v381, %v381
    %vm414 = vcmask 130048
    %v416 = vsel %vm414, %v313, 0
    %v419 = vsel %vm414, %v315, 0
    %v422 = vsel %vm414, %v317, 0
    %v425 = vsel %vm414, %v319, 0
    %427 = vmatpush.msra.mxu0 %v393
    %428 = vmatpush.msra.mxu0 %v392
    %429 = vmatpush.msra.mxu0 %v391
    %430 = vmatpush.msra.mxu0 %v390
    %431 = vmatpush.msra.mxu0 %v389
    %432 = vmatpush.msra.mxu0 %v388
    %433 = vmatpush.msra.mxu0 %v365
    %434 = vmatpush.msra.mxu0 %v363
    %435 = vmatpush.msra.mxu0 %v387
    %436 = vmatpush.msra.mxu0 %v386
    %437 = vmatpush.msra.mxu0 %v385
    %438 = vmatpush.msra.mxu0 %v384
    %439 = vmatpush.msra.mxu0 %v383
    %440 = vmatpush.msra.mxu0 %v382
    %441 = vmatpush.msra.mxu0 %v349
    %442 = vmatpush.msra.mxu0 %v347
    %443 = vmatmul.f32.gmra.mxu0 %v312
    %v444 = vpop.f32.mrf.mxu0
    %v445 = vadd.f32 %v327, %v444
    %446 = vmatmul.f32.gmra.mxu0 %v314
    %v447 = vpop.f32.mrf.mxu0
    %v448 = vadd.f32 %v332, %v447
    %449 = vmatmul.f32.gmra.mxu0 %v316
    %v450 = vpop.f32.mrf.mxu0
    %v451 = vadd.f32 %v337, %v450
    %452 = vmatmul.f32.gmra.mxu0 %v318
    %v453 = vpop.f32.mrf.mxu0
    %v454 = vadd.f32 %v342, %v453
    %455 = vdwg.mxu0
    %456 = vmatpush.msra.mxu0 0.0
    %457 = vmatpush.msra.mxu0 0.0
    %458 = vmatpush.msra.mxu0 0.0
    %459 = vmatpush.msra.mxu0 0.0
    %460 = vmatpush.msra.mxu0 0.0
    %461 = vmatpush.msra.mxu0 0.0
    %462 = vmatpush.msra.mxu0 0.0
    %463 = vmatpush.msra.mxu0 0.0
    %464 = vmatpush.msra.mxu0 0.0
    %465 = vmatpush.msra.mxu0 0.0
    %466 = vmatpush.msra.mxu0 0.0
    %467 = vmatpush.msra.mxu0 0.0
    %468 = vmatpush.msra.mxu0 0.0
    %469 = vmatpush.msra.mxu0 0.0
    %470 = vmatpush.msra.mxu0 %v395
    %471 = vmatpush.msra.mxu0 %v394
    %472 = vmatmul.f32.gmra.mxu0 %v416
    %v473 = vpop.f32.mrf.mxu0
    %v474 = vadd.f32 %v445, %v473
    %475 = vmatmul.f32.gmra.mxu0 %v419
    %v476 = vpop.f32.mrf.mxu0
    %v477 = vadd.f32 %v448, %v476
    %478 = vmatmul.f32.gmra.mxu0 %v422
    %v479 = vpop.f32.mrf.mxu0
    %v480 = vadd.f32 %v451, %v479
    %481 = vmatmul.f32.gmra.mxu0 %v425
    %v482 = vpop.f32.mrf.mxu0
    %v483 = vadd.f32 %v454, %v482
    %484 = vdwg.mxu0
    %vm485 = vcmp.ge.f32.partialorder %v474, 0.0
    %vm486 = vcmp.ge.f32.partialorder %v477, 0.0
    %vm487 = vcmp.ge.f32.partialorder %v480, 0.0
    %vm488 = vcmp.ge.f32.partialorder %v483, 0.0
    %v489 = vmul.f32 %v474, 0.01
    %v490 = vmul.f32 %v477, 0.01
    %v491 = vmul.f32 %v480, 0.01
    %v492 = vmul.f32 %v483, 0.01
    %v493 = vsel %vm485, %v474, %v489
    %v494 = vsel %vm486, %v477, %v490
    %v495 = vsel %vm487, %v480, %v491
    %v496 = vsel %vm488, %v483, %v492
    %v497 = vmul.f32 %v493, %v86
    %v498 = vmul.f32 %v494, %v86
    %v499 = vmul.f32 %v495, %v86
    %v500 = vmul.f32 %v496, %v86
    %v501 = vmul.f32 %v493, %v93
    %v502 = vmul.f32 %v494, %v93
    %v503 = vmul.f32 %v495, %v93
    %v504 = vmul.f32 %v496, %v93
    %v505 = vmul.f32 %v493, %v100
    %v506 = vmul.f32 %v494, %v100
    %v507 = vmul.f32 %v495, %v100
    %v508 = vmul.f32 %v496, %v100
    %v509 = vmul.f32 %v493, %v107
    %v510 = vmul.f32 %v494, %v107
    %v511 = vmul.f32 %v495, %v107
    %v512 = vmul.f32 %v496, %v107
    %v513 = vmul.f32 %v493, %v114
    %v514 = vmul.f32 %v494, %v114
    %v515 = vmul.f32 %v495, %v114
    %v516 = vmul.f32 %v496, %v114
    %v517 = vmul.f32 %v493, %v121
    %v518 = vmul.f32 %v494, %v121
    %v519 = vmul.f32 %v495, %v121
    %v520 = vmul.f32 %v496, %v121
    %v521 = vmul.f32 %v493, %v128
    %v522 = vmul.f32 %v494, %v128
    %v523 = vmul.f32 %v495, %v128
    %v524 = vmul.f32 %v496, %v128
    %v525 = vmul.f32 %v493, %v135
    %v526 = vmul.f32 %v494, %v135
    %v527 = vmul.f32 %v495, %v135
    %v528 = vmul.f32 %v496, %v135
    %533 = vrot.lane.b32.xlu0 %v501, 127
    %v534 = vpop.permute.xlu0 %533
    %535 = vrot.lane.b32.xlu0 %v502, 127
    %v536 = vpop.permute.xlu0 %535
    %537 = vrot.lane.b32.xlu0 %v503, 127
    %v538 = vpop.permute.xlu0 %537
    %539 = vrot.lane.b32.xlu0 %v504, 127
    %v540 = vpop.permute.xlu0 %539
    %545 = vrot.lane.b32.xlu0 %v505, 126
    %v546 = vpop.permute.xlu0 %545
    %547 = vrot.lane.b32.xlu0 %v506, 126
    %v548 = vpop.permute.xlu0 %547
    %549 = vrot.lane.b32.xlu0 %v507, 126
    %v550 = vpop.permute.xlu0 %549
    %551 = vrot.lane.b32.xlu0 %v508, 126
    %v552 = vpop.permute.xlu0 %551
    %557 = vrot.lane.b32.xlu0 %v509, 120
    %v558 = vpop.permute.xlu0 %557
    %559 = vrot.lane.b32.xlu0 %v510, 120
    %v560 = vpop.permute.xlu0 %559
    %561 = vrot.lane.b32.xlu0 %v511, 120
    %v562 = vpop.permute.xlu0 %561
    %563 = vrot.lane.b32.xlu0 %v512, 120
    %v564 = vpop.permute.xlu0 %563
    %569 = vrot.lane.b32.xlu0 %v493, 119
    %v570 = vpop.permute.xlu0 %569
    %571 = vrot.lane.b32.xlu0 %v494, 119
    %v572 = vpop.permute.xlu0 %571
    %573 = vrot.lane.b32.xlu0 %v495, 119
    %v574 = vpop.permute.xlu0 %573
    %575 = vrot.lane.b32.xlu0 %v496, 119
    %v576 = vpop.permute.xlu0 %575
    %581 = vrot.lane.b32.xlu0 %v513, 118
    %v582 = vpop.permute.xlu0 %581
    %583 = vrot.lane.b32.xlu0 %v514, 118
    %v584 = vpop.permute.xlu0 %583
    %585 = vrot.lane.b32.xlu0 %v515, 118
    %v586 = vpop.permute.xlu0 %585
    %587 = vrot.lane.b32.xlu0 %v516, 118
    %v588 = vpop.permute.xlu0 %587
    %593 = vrot.lane.b32.xlu0 %v517, 112
    %v594 = vpop.permute.xlu0 %593
    %595 = vrot.lane.b32.xlu0 %v518, 112
    %v596 = vpop.permute.xlu0 %595
    %597 = vrot.lane.b32.xlu0 %v519, 112
    %v598 = vpop.permute.xlu0 %597
    %599 = vrot.lane.b32.xlu0 %v520, 112
    %v600 = vpop.permute.xlu0 %599
    %605 = vrot.lane.b32.xlu0 %v521, 111
    %v606 = vpop.permute.xlu0 %605
    %607 = vrot.lane.b32.xlu0 %v522, 111
    %v608 = vpop.permute.xlu0 %607
    %609 = vrot.lane.b32.xlu0 %v523, 111
    %v610 = vpop.permute.xlu0 %609
    %611 = vrot.lane.b32.xlu0 %v524, 111
    %v612 = vpop.permute.xlu0 %611
    %617 = vrot.lane.b32.xlu0 %v525, 110
    %v618 = vpop.permute.xlu0 %617
    %619 = vrot.lane.b32.xlu0 %v526, 110
    %v620 = vpop.permute.xlu0 %619
    %621 = vrot.lane.b32.xlu0 %v527, 110
    %v622 = vpop.permute.xlu0 %621
    %623 = vrot.lane.b32.xlu0 %v528, 110
    %v624 = vpop.permute.xlu0 %623
    %v625 = vld [vmem:[%s6] sm:$0xff]
    %v626 = vld [vmem:[%s6 + $0x8] sm:$0xff]
    %v627 = vld [vmem:[%s6 + $0x10] sm:$0xff]
    %v628 = vld [vmem:[%s6 + $0x18] sm:$0xff]
    %v629 = vld [vmem:[%s6 + $0x20] sm:$0xff]
    %v630 = vld [vmem:[%s6 + $0x28] sm:$0xff]
    %v631 = vld [vmem:[%s6 + $0x30] sm:$0xff]
    %v632 = vld [vmem:[%s6 + $0x38] sm:$0xff]
    %v633 = vld [vmem:[%s6 + $0x40] sm:$0xff]
    %v634 = vld [vmem:[%s6 + $0x48] sm:$0xff]
    %v635 = vld [vmem:[%s6 + $0x50] sm:$0xff]
    %v636 = vld [vmem:[%s6 + $0x58] sm:$0xff]
    %v637 = vld [vmem:[%s7] sm:$0xff]
    %v638 = vld [vmem:[%s7 + $0x8] sm:$0xff]
    %v639 = vld [vmem:[%s7 + $0x10] sm:$0xff]
    %v640 = vld [vmem:[%s7 + $0x18] sm:$0xff]
    %642 = vset.pattern.permute.xlu0 0
    %643 = vperm.xlu0 %642, %v637
    %v644 = vpop.permute.xlu0 %643
    %647 = vset.pattern.permute.xlu0 0
    %648 = vperm.xlu0 %647, %v638
    %v649 = vpop.permute.xlu0 %648
    %652 = vset.pattern.permute.xlu0 0
    %653 = vperm.xlu0 %652, %v639
    %v654 = vpop.permute.xlu0 %653
    %657 = vset.pattern.permute.xlu0 0
    %658 = vperm.xlu0 %657, %v640
    %v659 = vpop.permute.xlu0 %658
    %665 = vrot.lane.b32.xlu0 %v497, 9
    %v666 = vpop.permute.xlu0 %665
    %667 = vrot.lane.b32.xlu0 %v498, 9
    %v668 = vpop.permute.xlu0 %667
    %669 = vrot.lane.b32.xlu0 %v499, 9
    %v670 = vpop.permute.xlu0 %669
    %671 = vrot.lane.b32.xlu0 %v500, 9
    %v672 = vpop.permute.xlu0 %671
    %673 = vrot.lane.b32.xlu0 %v534, 9
    %v674 = vpop.permute.xlu0 %673
    %675 = vrot.lane.b32.xlu0 %v536, 9
    %v676 = vpop.permute.xlu0 %675
    %677 = vrot.lane.b32.xlu0 %v538, 9
    %v678 = vpop.permute.xlu0 %677
    %679 = vrot.lane.b32.xlu0 %v540, 9
    %v680 = vpop.permute.xlu0 %679
    %681 = vrot.lane.b32.xlu0 %v546, 9
    %v682 = vpop.permute.xlu0 %681
    %683 = vrot.lane.b32.xlu0 %v548, 9
    %v684 = vpop.permute.xlu0 %683
    %685 = vrot.lane.b32.xlu0 %v550, 9
    %v686 = vpop.permute.xlu0 %685
    %687 = vrot.lane.b32.xlu0 %v552, 9
    %v688 = vpop.permute.xlu0 %687
    %689 = vrot.lane.b32.xlu0 %v558, 9
    %v690 = vpop.permute.xlu0 %689
    %691 = vrot.lane.b32.xlu0 %v560, 9
    %v692 = vpop.permute.xlu0 %691
    %693 = vrot.lane.b32.xlu0 %v562, 9
    %v694 = vpop.permute.xlu0 %693
    %695 = vrot.lane.b32.xlu0 %v564, 9
    %v696 = vpop.permute.xlu0 %695
    %697 = vrot.lane.b32.xlu0 %v570, 9
    %v698 = vpop.permute.xlu0 %697
    %699 = vrot.lane.b32.xlu0 %v572, 9
    %v700 = vpop.permute.xlu0 %699
    %701 = vrot.lane.b32.xlu0 %v574, 9
    %v702 = vpop.permute.xlu0 %701
    %703 = vrot.lane.b32.xlu0 %v576, 9
    %v704 = vpop.permute.xlu0 %703
    %705 = vrot.lane.b32.xlu0 %v582, 9
    %v706 = vpop.permute.xlu0 %705
    %707 = vrot.lane.b32.xlu0 %v584, 9
    %v708 = vpop.permute.xlu0 %707
    %709 = vrot.lane.b32.xlu0 %v586, 9
    %v710 = vpop.permute.xlu0 %709
    %711 = vrot.lane.b32.xlu0 %v588, 9
    %v712 = vpop.permute.xlu0 %711
    %713 = vrot.lane.b32.xlu0 %v594, 9
    %v714 = vpop.permute.xlu0 %713
    %715 = vrot.lane.b32.xlu0 %v596, 9
    %v716 = vpop.permute.xlu0 %715
    %717 = vrot.lane.b32.xlu0 %v598, 9
    %v718 = vpop.permute.xlu0 %717
    %719 = vrot.lane.b32.xlu0 %v600, 9
    %v720 = vpop.permute.xlu0 %719
    %721 = vrot.lane.b32.xlu0 %v606, 9
    %v722 = vpop.permute.xlu0 %721
    %723 = vrot.lane.b32.xlu0 %v608, 9
    %v724 = vpop.permute.xlu0 %723
    %725 = vrot.lane.b32.xlu0 %v610, 9
    %v726 = vpop.permute.xlu0 %725
    %727 = vrot.lane.b32.xlu0 %v612, 9
    %v728 = vpop.permute.xlu0 %727
    %729 = vrot.lane.b32.xlu0 %v618, 9
    %v730 = vpop.permute.xlu0 %729
    %731 = vrot.lane.b32.xlu0 %v620, 9
    %v732 = vpop.permute.xlu0 %731
    %733 = vrot.lane.b32.xlu0 %v622, 9
    %v734 = vpop.permute.xlu0 %733
    %735 = vrot.lane.b32.xlu0 %v624, 9
    %v736 = vpop.permute.xlu0 %735
    %v737 = vsel %vm195, %v674, %v674
    %v738 = vsel %vm195, %v676, %v676
    %v739 = vsel %vm195, %v678, %v678
    %v740 = vsel %vm195, %v680, %v680
    %v741 = vsel %vm195, %v682, %v682
    %v742 = vsel %vm195, %v684, %v684
    %v743 = vsel %vm195, %v686, %v686
    %v744 = vsel %vm195, %v688, %v688
    %v745 = vsel %vm195, %v690, %v690
    %v746 = vsel %vm195, %v692, %v692
    %v747 = vsel %vm195, %v694, %v694
    %v748 = vsel %vm195, %v696, %v696
    %v749 = vsel %vm195, %v706, %v706
    %v750 = vsel %vm195, %v708, %v708
    %v751 = vsel %vm195, %v710, %v710
    %v752 = vsel %vm195, %v712, %v712
    %v753 = vsel %vm195, %v714, %v714
    %v754 = vsel %vm195, %v716, %v716
    %v755 = vsel %vm195, %v718, %v718
    %v756 = vsel %vm195, %v720, %v720
    %v757 = vsel %vm195, %v722, %v722
    %v758 = vsel %vm195, %v724, %v724
    %v759 = vsel %vm195, %v726, %v726
    %v760 = vsel %vm195, %v728, %v728
    %v761 = vsel %vm195, %v730, %v730
    %v762 = vsel %vm195, %v732, %v732
    %v763 = vsel %vm195, %v734, %v734
    %v764 = vsel %vm195, %v736, %v736
    %vm801 = vcmask 261120
    %v803 = vsel %vm801, %v627, 0
    %v806 = vsel %vm801, %v630, 0
    %v809 = vsel %vm801, %v633, 0
    %v812 = vsel %vm801, %v636, 0
    %814 = vmatpush.msra.mxu0 %v748
    %815 = vmatpush.msra.mxu0 %v747
    %816 = vmatpush.msra.mxu0 %v746
    %817 = vmatpush.msra.mxu0 %v745
    %818 = vmatpush.msra.mxu0 %v744
    %819 = vmatpush.msra.mxu0 %v743
    %820 = vmatpush.msra.mxu0 %v742
    %821 = vmatpush.msra.mxu0 %v741
    %822 = vmatpush.msra.mxu0 %v740
    %823 = vmatpush.msra.mxu0 %v739
    %824 = vmatpush.msra.mxu0 %v738
    %825 = vmatpush.msra.mxu0 %v737
    %826 = vmatpush.msra.mxu0 %v672
    %827 = vmatpush.msra.mxu0 %v670
    %828 = vmatpush.msra.mxu0 %v668
    %829 = vmatpush.msra.mxu0 %v666
    %830 = vmatmul.f32.gmra.mxu0 %v625
    %v831 = vpop.f32.mrf.mxu0
    %v832 = vadd.f32 %v644, %v831
    %833 = vmatmul.f32.gmra.mxu0 %v628
    %v834 = vpop.f32.mrf.mxu0
    %v835 = vadd.f32 %v649, %v834
    %836 = vmatmul.f32.gmra.mxu0 %v631
    %v837 = vpop.f32.mrf.mxu0
    %v838 = vadd.f32 %v654, %v837
    %839 = vmatmul.f32.gmra.mxu0 %v634
    %v840 = vpop.f32.mrf.mxu0
    %v841 = vadd.f32 %v659, %v840
    %842 = vdwg.mxu0
    %843 = vmatpush.msra.mxu0 %v760
    %844 = vmatpush.msra.mxu0 %v759
    %845 = vmatpush.msra.mxu0 %v758
    %846 = vmatpush.msra.mxu0 %v757
    %847 = vmatpush.msra.mxu0 %v756
    %848 = vmatpush.msra.mxu0 %v755
    %849 = vmatpush.msra.mxu0 %v754
    %850 = vmatpush.msra.mxu0 %v753
    %851 = vmatpush.msra.mxu0 %v752
    %852 = vmatpush.msra.mxu0 %v751
    %853 = vmatpush.msra.mxu0 %v750
    %854 = vmatpush.msra.mxu0 %v749
    %855 = vmatpush.msra.mxu0 %v704
    %856 = vmatpush.msra.mxu0 %v702
    %857 = vmatpush.msra.mxu0 %v700
    %858 = vmatpush.msra.mxu0 %v698
    %859 = vmatmul.f32.gmra.mxu0 %v626
    %v860 = vpop.f32.mrf.mxu0
    %v861 = vadd.f32 %v832, %v860
    %862 = vmatmul.f32.gmra.mxu0 %v629
    %v863 = vpop.f32.mrf.mxu0
    %v864 = vadd.f32 %v835, %v863
    %865 = vmatmul.f32.gmra.mxu0 %v632
    %v866 = vpop.f32.mrf.mxu0
    %v867 = vadd.f32 %v838, %v866
    %868 = vmatmul.f32.gmra.mxu0 %v635
    %v869 = vpop.f32.mrf.mxu0
    %v870 = vadd.f32 %v841, %v869
    %871 = vdwg.mxu0
    %872 = vmatpush.msra.mxu0 0.0
    %873 = vmatpush.msra.mxu0 0.0
    %874 = vmatpush.msra.mxu0 0.0
    %875 = vmatpush.msra.mxu0 0.0
    %876 = vmatpush.msra.mxu0 0.0
    %877 = vmatpush.msra.mxu0 0.0
    %878 = vmatpush.msra.mxu0 0.0
    %879 = vmatpush.msra.mxu0 0.0
    %880 = vmatpush.msra.mxu0 0.0
    %881 = vmatpush.msra.mxu0 0.0
    %882 = vmatpush.msra.mxu0 0.0
    %883 = vmatpush.msra.mxu0 0.0
    %884 = vmatpush.msra.mxu0 %v764
    %885 = vmatpush.msra.mxu0 %v763
    %886 = vmatpush.msra.mxu0 %v762
    %887 = vmatpush.msra.mxu0 %v761
    %888 = vmatmul.f32.gmra.mxu0 %v803
    %v889 = vpop.f32.mrf.mxu0
    %v890 = vadd.f32 %v861, %v889
    %891 = vmatmul.f32.gmra.mxu0 %v806
    %v892 = vpop.f32.mrf.mxu0
    %v893 = vadd.f32 %v864, %v892
    %894 = vmatmul.f32.gmra.mxu0 %v809
    %v895 = vpop.f32.mrf.mxu0
    %v896 = vadd.f32 %v867, %v895
    %897 = vmatmul.f32.gmra.mxu0 %v812
    %v898 = vpop.f32.mrf.mxu0
    %v899 = vadd.f32 %v870, %v898
    %900 = vdwg.mxu0
    %vm901 = vcmp.ge.f32.partialorder %v890, 0.0
    %vm902 = vcmp.ge.f32.partialorder %v893, 0.0
    %vm903 = vcmp.ge.f32.partialorder %v896, 0.0
    %vm904 = vcmp.ge.f32.partialorder %v899, 0.0
    %v905 = vmul.f32 %v890, 0.01
    %v906 = vmul.f32 %v893, 0.01
    %v907 = vmul.f32 %v896, 0.01
    %v908 = vmul.f32 %v899, 0.01
    %v909 = vsel %vm901, %v890, %v905
    %v910 = vsel %vm902, %v893, %v906
    %v911 = vsel %vm903, %v896, %v907
    %v912 = vsel %vm904, %v899, %v908
    %vm913 = vcmask 516096
    %914 = vst.msk [vmem:[#allocation2] sm:$0x1] %vm913, %v909
    %916 = vrot.lane.b32.xlu0 %v909, 64
    %v917 = vpop.permute.xlu0 %916
    %919 = vst.msk [vmem:[#allocation2 + $0x1] sm:$0x1] %vm913, %v917
    %v920 = vrot.slane %v909, 7
    %v921 = vrot.slane %v920, 2
    %922 = vrot.lane.b32.xlu0 %v921, 64
    %v923 = vpop.permute.xlu0 %922
    %vm925 = vcmask 1040896
    %926 = vst.msk [vmem:[#allocation2] sm:$0x1] %vm925, %v923
    %928 = vst.msk [vmem:[#allocation2 + $0x1] sm:$0x1] %vm925, %v921
    %929 = vst.sshfl [vmem:[#allocation1] sm:$0xff pattern:$0x73625140] %v909
    %s930 = scalar_lea.vmem [#allocation1], 1
    %v931 = vld [vmem:[%s930] ss:$4 sm:$0xff]
    %933 = vst.msk [vmem:[#allocation2 + $0x2] sm:$0x1] %vm913, %v931
    %934 = vst.sshfl [vmem:[#allocation1] sm:$0xff pattern:$0x73625140] %v909
    %s935 = scalar_lea.vmem [#allocation1], 1
    %v936 = vld [vmem:[%s935] ss:$4 sm:$0xff]
    %937 = vrot.lane.b32.xlu0 %v936, 64
    %v938 = vpop.permute.xlu0 %937
    %940 = vst.msk [vmem:[#allocation2 + $0x3] sm:$0x1] %vm913, %v938
    %941 = vst.sshfl [vmem:[#allocation1] sm:$0xff pattern:$0x73625140] %v909
    %s942 = scalar_lea.vmem [#allocation1], 1
    %v943 = vld [vmem:[%s942] ss:$4 sm:$0xff]
    %v944 = vrot.slane %v943, 7
    %v945 = vrot.slane %v944, 2
    %946 = vrot.lane.b32.xlu0 %v945, 64
    %v947 = vpop.permute.xlu0 %946
    %949 = vst.msk [vmem:[#allocation2 + $0x2] sm:$0x1] %vm925, %v947
    %950 = vst.sshfl [vmem:[#allocation1] sm:$0xff pattern:$0x73625140] %v909
    %s951 = scalar_lea.vmem [#allocation1], 1
    %v952 = vld [vmem:[%s951] ss:$4 sm:$0xff]
    %v953 = vrot.slane %v952, 7
    %v954 = vrot.slane %v953, 2
    %956 = vst.msk [vmem:[#allocation2 + $0x3] sm:$0x1] %vm925, %v954
    %957 = vst.sshfl [vmem:[#allocation1] sm:$0xff pattern:$0x73625140] %v909
    %s958 = scalar_lea.vmem [#allocation1], 2
    %v959 = vld [vmem:[%s958] ss:$4 sm:$0xff]
    %961 = vst.msk [vmem:[#allocation2 + $0x4] sm:$0x1] %vm913, %v959
    %962 = vst.sshfl [vmem:[#allocation1] sm:$0xff pattern:$0x73625140] %v909
    %s963 = scalar_lea.vmem [#allocation1], 2
    %v964 = vld [vmem:[%s963] ss:$4 sm:$0xff]
    %965 = vrot.lane.b32.xlu0 %v964, 64
    %v966 = vpop.permute.xlu0 %965
    %968 = vst.msk [vmem:[#allocation2 + $0x5] sm:$0x1] %vm913, %v966
    %969 = vst.sshfl [vmem:[#allocation1] sm:$0xff pattern:$0x73625140] %v909
    %s970 = scalar_lea.vmem [#allocation1], 2
    %v971 = vld [vmem:[%s970] ss:$4 sm:$0xff]
    %v972 = vrot.slane %v971, 7
    %v973 = vrot.slane %v972, 2
    %974 = vrot.lane.b32.xlu0 %v973, 64
    %v975 = vpop.permute.xlu0 %974
    %977 = vst.msk [vmem:[#allocation2 + $0x4] sm:$0x1] %vm925, %v975
    %978 = vst.sshfl [vmem:[#allocation1] sm:$0xff pattern:$0x73625140] %v909
    %s979 = scalar_lea.vmem [#allocation1], 2
    %v980 = vld [vmem:[%s979] ss:$4 sm:$0xff]
    %v981 = vrot.slane %v980, 7
    %v982 = vrot.slane %v981, 2
    %984 = vst.msk [vmem:[#allocation2 + $0x5] sm:$0x1] %vm925, %v982
    %985 = vst.sshfl [vmem:[#allocation1] sm:$0xff pattern:$0x73625140] %v909
    %s986 = scalar_lea.vmem [#allocation1], 3
    %v987 = vld [vmem:[%s986] ss:$4 sm:$0xff]
    %989 = vst.msk [vmem:[#allocation2 + $0x6] sm:$0x1] %vm913, %v987
    %990 = vst.sshfl [vmem:[#allocation1] sm:$0xff pattern:$0x73625140] %v909
    %s991 = scalar_lea.vmem [#allocation1], 3
    %v992 = vld [vmem:[%s991] ss:$4 sm:$0xff]
    %993 = vrot.lane.b32.xlu0 %v992, 64
    %v994 = vpop.permute.xlu0 %993
    %996 = vst.msk [vmem:[#allocation2 + $0x7] sm:$0x1] %vm913, %v994
    %997 = vst.sshfl [vmem:[#allocation1] sm:$0xff pattern:$0x73625140] %v909
    %s998 = scalar_lea.vmem [#allocation1], 3
    %v999 = vld [vmem:[%s998] ss:$4 sm:$0xff]
    %v1000 = vrot.slane %v999, 7
    %v1001 = vrot.slane %v1000, 2
    %1002 = vrot.lane.b32.xlu0 %v1001, 64
    %v1003 = vpop.permute.xlu0 %1002
    %1005 = vst.msk [vmem:[#allocation2 + $0x6] sm:$0x1] %vm925, %v1003
    %1006 = vst.sshfl [vmem:[#allocation1] sm:$0xff pattern:$0x73625140] %v909
    %s1007 = scalar_lea.vmem [#allocation1], 3
    %v1008 = vld [vmem:[%s1007] ss:$4 sm:$0xff]
    %v1009 = vrot.slane %v1008, 7
    %v1010 = vrot.slane %v1009, 2
    %1012 = vst.msk [vmem:[#allocation2 + $0x7] sm:$0x1] %vm925, %v1010
    %1013 = vst.msk [vmem:[#allocation2 + $0x8] sm:$0x1] %vm913, %v910
    %1015 = vrot.lane.b32.xlu0 %v910, 64
    %v1016 = vpop.permute.xlu0 %1015
    %1018 = vst.msk [vmem:[#allocation2 + $0x9] sm:$0x1] %vm913, %v1016
    %v1019 = vrot.slane %v910, 7
    %v1020 = vrot.slane %v1019, 2
    %1021 = vrot.lane.b32.xlu0 %v1020, 64
    %v1022 = vpop.permute.xlu0 %1021
    %1024 = vst.msk [vmem:[#allocation2 + $0x8] sm:$0x1] %vm925, %v1022
    %1026 = vst.msk [vmem:[#allocation2 + $0x9] sm:$0x1] %vm925, %v1020
    %1027 = vst.sshfl [vmem:[#allocation1] sm:$0xff pattern:$0x73625140] %v910
    %s1028 = scalar_lea.vmem [#allocation1], 1
    %v1029 = vld [vmem:[%s1028] ss:$4 sm:$0xff]
    %1031 = vst.msk [vmem:[#allocation2 + $0xa] sm:$0x1] %vm913, %v1029
    %1032 = vst.sshfl [vmem:[#allocation1] sm:$0xff pattern:$0x73625140] %v910
    %s1033 = scalar_lea.vmem [#allocation1], 1
    %v1034 = vld [vmem:[%s1033] ss:$4 sm:$0xff]
    %1035 = vrot.lane.b32.xlu0 %v1034, 64
    %v1036 = vpop.permute.xlu0 %1035
    %1038 = vst.msk [vmem:[#allocation2 + $0xb] sm:$0x1] %vm913, %v1036
    %1039 = vst.sshfl [vmem:[#allocation1] sm:$0xff pattern:$0x73625140] %v910
    %s1040 = scalar_lea.vmem [#allocation1], 1
    %v1041 = vld [vmem:[%s1040] ss:$4 sm:$0xff]
    %v1042 = vrot.slane %v1041, 7
    %v1043 = vrot.slane %v1042, 2
    %1044 = vrot.lane.b32.xlu0 %v1043, 64
    %v1045 = vpop.permute.xlu0 %1044
    %1047 = vst.msk [vmem:[#allocation2 + $0xa] sm:$0x1] %vm925, %v1045
    %1048 = vst.sshfl [vmem:[#allocation1] sm:$0xff pattern:$0x73625140] %v910
    %s1049 = scalar_lea.vmem [#allocation1], 1
    %v1050 = vld [vmem:[%s1049] ss:$4 sm:$0xff]
    %v1051 = vrot.slane %v1050, 7
    %v1052 = vrot.slane %v1051, 2
    %1054 = vst.msk [vmem:[#allocation2 + $0xb] sm:$0x1] %vm925, %v1052
    %1055 = vst.sshfl [vmem:[#allocation1] sm:$0xff pattern:$0x73625140] %v910
    %s1056 = scalar_lea.vmem [#allocation1], 2
    %v1057 = vld [vmem:[%s1056] ss:$4 sm:$0xff]
    %1059 = vst.msk [vmem:[#allocation2 + $0xc] sm:$0x1] %vm913, %v1057
    %1060 = vst.sshfl [vmem:[#allocation1] sm:$0xff pattern:$0x73625140] %v910
    %s1061 = scalar_lea.vmem [#allocation1], 2
    %v1062 = vld [vmem:[%s1061] ss:$4 sm:$0xff]
    %1063 = vrot.lane.b32.xlu0 %v1062, 64
    %v1064 = vpop.permute.xlu0 %1063
    %1066 = vst.msk [vmem:[#allocation2 + $0xd] sm:$0x1] %vm913, %v1064
    %1067 = vst.sshfl [vmem:[#allocation1] sm:$0xff pattern:$0x73625140] %v910
    %s1068 = scalar_lea.vmem [#allocation1], 2
    %v1069 = vld [vmem:[%s1068] ss:$4 sm:$0xff]
    %v1070 = vrot.slane %v1069, 7
    %v1071 = vrot.slane %v1070, 2
    %1072 = vrot.lane.b32.xlu0 %v1071, 64
    %v1073 = vpop.permute.xlu0 %1072
    %1075 = vst.msk [vmem:[#allocation2 + $0xc] sm:$0x1] %vm925, %v1073
    %1076 = vst.sshfl [vmem:[#allocation1] sm:$0xff pattern:$0x73625140] %v910
    %s1077 = scalar_lea.vmem [#allocation1], 2
    %v1078 = vld [vmem:[%s1077] ss:$4 sm:$0xff]
    %v1079 = vrot.slane %v1078, 7
    %v1080 = vrot.slane %v1079, 2
    %1082 = vst.msk [vmem:[#allocation2 + $0xd] sm:$0x1] %vm925, %v1080
    %1083 = vst.sshfl [vmem:[#allocation1] sm:$0xff pattern:$0x73625140] %v910
    %s1084 = scalar_lea.vmem [#allocation1], 3
    %v1085 = vld [vmem:[%s1084] ss:$4 sm:$0xff]
    %1087 = vst.msk [vmem:[#allocation2 + $0xe] sm:$0x1] %vm913, %v1085
    %1088 = vst.sshfl [vmem:[#allocation1] sm:$0xff pattern:$0x73625140] %v910
    %s1089 = scalar_lea.vmem [#allocation1], 3
    %v1090 = vld [vmem:[%s1089] ss:$4 sm:$0xff]
    %1091 = vrot.lane.b32.xlu0 %v1090, 64
    %v1092 = vpop.permute.xlu0 %1091
    %1094 = vst.msk [vmem:[#allocation2 + $0xf] sm:$0x1] %vm913, %v1092
    %1095 = vst.sshfl [vmem:[#allocation1] sm:$0xff pattern:$0x73625140] %v910
    %s1096 = scalar_lea.vmem [#allocation1], 3
    %v1097 = vld [vmem:[%s1096] ss:$4 sm:$0xff]
    %v1098 = vrot.slane %v1097, 7
    %v1099 = vrot.slane %v1098, 2
    %1100 = vrot.lane.b32.xlu0 %v1099, 64
    %v1101 = vpop.permute.xlu0 %1100
    %1103 = vst.msk [vmem:[#allocation2 + $0xe] sm:$0x1] %vm925, %v1101
    %1104 = vst.sshfl [vmem:[#allocation1] sm:$0xff pattern:$0x73625140] %v910
    %s1105 = scalar_lea.vmem [#allocation1], 3
    %v1106 = vld [vmem:[%s1105] ss:$4 sm:$0xff]
    %v1107 = vrot.slane %v1106, 7
    %v1108 = vrot.slane %v1107, 2
    %1110 = vst.msk [vmem:[#allocation2 + $0xf] sm:$0x1] %vm925, %v1108
    %1111 = vst.msk [vmem:[#allocation2 + $0x10] sm:$0x1] %vm913, %v911
    %1113 = vrot.lane.b32.xlu0 %v911, 64
    %v1114 = vpop.permute.xlu0 %1113
    %1116 = vst.msk [vmem:[#allocation2 + $0x11] sm:$0x1] %vm913, %v1114
    %v1117 = vrot.slane %v911, 7
    %v1118 = vrot.slane %v1117, 2
    %1119 = vrot.lane.b32.xlu0 %v1118, 64
    %v1120 = vpop.permute.xlu0 %1119
    %1122 = vst.msk [vmem:[#allocation2 + $0x10] sm:$0x1] %vm925, %v1120
    %1124 = vst.msk [vmem:[#allocation2 + $0x11] sm:$0x1] %vm925, %v1118
    %1125 = vst.sshfl [vmem:[#allocation1] sm:$0xff pattern:$0x73625140] %v911
    %s1126 = scalar_lea.vmem [#allocation1], 1
    %v1127 = vld [vmem:[%s1126] ss:$4 sm:$0xff]
    %1129 = vst.msk [vmem:[#allocation2 + $0x12] sm:$0x1] %vm913, %v1127
    %1130 = vst.sshfl [vmem:[#allocation1] sm:$0xff pattern:$0x73625140] %v911
    %s1131 = scalar_lea.vmem [#allocation1], 1
    %v1132 = vld [vmem:[%s1131] ss:$4 sm:$0xff]
    %1133 = vrot.lane.b32.xlu0 %v1132, 64
    %v1134 = vpop.permute.xlu0 %1133
    %1136 = vst.msk [vmem:[#allocation2 + $0x13] sm:$0x1] %vm913, %v1134
    %1137 = vst.sshfl [vmem:[#allocation1] sm:$0xff pattern:$0x73625140] %v911
    %s1138 = scalar_lea.vmem [#allocation1], 1
    %v1139 = vld [vmem:[%s1138] ss:$4 sm:$0xff]
    %v1140 = vrot.slane %v1139, 7
    %v1141 = vrot.slane %v1140, 2
    %1142 = vrot.lane.b32.xlu0 %v1141, 64
    %v1143 = vpop.permute.xlu0 %1142
    %1145 = vst.msk [vmem:[#allocation2 + $0x12] sm:$0x1] %vm925, %v1143
    %1146 = vst.sshfl [vmem:[#allocation1] sm:$0xff pattern:$0x73625140] %v911
    %s1147 = scalar_lea.vmem [#allocation1], 1
    %v1148 = vld [vmem:[%s1147] ss:$4 sm:$0xff]
    %v1149 = vrot.slane %v1148, 7
    %v1150 = vrot.slane %v1149, 2
    %1152 = vst.msk [vmem:[#allocation2 + $0x13] sm:$0x1] %vm925, %v1150
    %1153 = vst.sshfl [vmem:[#allocation1] sm:$0xff pattern:$0x73625140] %v911
    %s1154 = scalar_lea.vmem [#allocation1], 2
    %v1155 = vld [vmem:[%s1154] ss:$4 sm:$0xff]
    %1157 = vst.msk [vmem:[#allocation2 + $0x14] sm:$0x1] %vm913, %v1155
    %1158 = vst.sshfl [vmem:[#allocation1] sm:$0xff pattern:$0x73625140] %v911
    %s1159 = scalar_lea.vmem [#allocation1], 2
    %v1160 = vld [vmem:[%s1159] ss:$4 sm:$0xff]
    %1161 = vrot.lane.b32.xlu0 %v1160, 64
    %v1162 = vpop.permute.xlu0 %1161
    %1164 = vst.msk [vmem:[#allocation2 + $0x15] sm:$0x1] %vm913, %v1162
    %1165 = vst.sshfl [vmem:[#allocation1] sm:$0xff pattern:$0x73625140] %v911
    %s1166 = scalar_lea.vmem [#allocation1], 2
    %v1167 = vld [vmem:[%s1166] ss:$4 sm:$0xff]
    %v1168 = vrot.slane %v1167, 7
    %v1169 = vrot.slane %v1168, 2
    %1170 = vrot.lane.b32.xlu0 %v1169, 64
    %v1171 = vpop.permute.xlu0 %1170
    %1173 = vst.msk [vmem:[#allocation2 + $0x14] sm:$0x1] %vm925, %v1171
    %1174 = vst.sshfl [vmem:[#allocation1] sm:$0xff pattern:$0x73625140] %v911
    %s1175 = scalar_lea.vmem [#allocation1], 2
    %v1176 = vld [vmem:[%s1175] ss:$4 sm:$0xff]
    %v1177 = vrot.slane %v1176, 7
    %v1178 = vrot.slane %v1177, 2
    %1180 = vst.msk [vmem:[#allocation2 + $0x15] sm:$0x1] %vm925, %v1178
    %1181 = vst.sshfl [vmem:[#allocation1] sm:$0xff pattern:$0x73625140] %v911
    %s1182 = scalar_lea.vmem [#allocation1], 3
    %v1183 = vld [vmem:[%s1182] ss:$4 sm:$0xff]
    %1185 = vst.msk [vmem:[#allocation2 + $0x16] sm:$0x1] %vm913, %v1183
    %1186 = vst.sshfl [vmem:[#allocation1] sm:$0xff pattern:$0x73625140] %v911
    %s1187 = scalar_lea.vmem [#allocation1], 3
    %v1188 = vld [vmem:[%s1187] ss:$4 sm:$0xff]
    %1189 = vrot.lane.b32.xlu0 %v1188, 64
    %v1190 = vpop.permute.xlu0 %1189
    %1192 = vst.msk [vmem:[#allocation2 + $0x17] sm:$0x1] %vm913, %v1190
    %1193 = vst.sshfl [vmem:[#allocation1] sm:$0xff pattern:$0x73625140] %v911
    %s1194 = scalar_lea.vmem [#allocation1], 3
    %v1195 = vld [vmem:[%s1194] ss:$4 sm:$0xff]
    %v1196 = vrot.slane %v1195, 7
    %v1197 = vrot.slane %v1196, 2
    %1198 = vrot.lane.b32.xlu0 %v1197, 64
    %v1199 = vpop.permute.xlu0 %1198
    %1201 = vst.msk [vmem:[#allocation2 + $0x16] sm:$0x1] %vm925, %v1199
    %1202 = vst.sshfl [vmem:[#allocation1] sm:$0xff pattern:$0x73625140] %v911
    %s1203 = scalar_lea.vmem [#allocation1], 3
    %v1204 = vld [vmem:[%s1203] ss:$4 sm:$0xff]
    %v1205 = vrot.slane %v1204, 7
    %v1206 = vrot.slane %v1205, 2
    %1208 = vst.msk [vmem:[#allocation2 + $0x17] sm:$0x1] %vm925, %v1206
    %1209 = vst.msk [vmem:[#allocation2 + $0x18] sm:$0x1] %vm913, %v912
    %1211 = vrot.lane.b32.xlu0 %v912, 64
    %v1212 = vpop.permute.xlu0 %1211
    %1214 = vst.msk [vmem:[#allocation2 + $0x19] sm:$0x1] %vm913, %v1212
    %v1215 = vrot.slane %v912, 7
    %v1216 = vrot.slane %v1215, 2
    %1217 = vrot.lane.b32.xlu0 %v1216, 64
    %v1218 = vpop.permute.xlu0 %1217
    %1220 = vst.msk [vmem:[#allocation2 + $0x18] sm:$0x1] %vm925, %v1218
    %1222 = vst.msk [vmem:[#allocation2 + $0x19] sm:$0x1] %vm925, %v1216
    %1223 = vst.sshfl [vmem:[#allocation1] sm:$0xff pattern:$0x73625140] %v912
    %s1224 = scalar_lea.vmem [#allocation1], 1
    %v1225 = vld [vmem:[%s1224] ss:$4 sm:$0xff]
    %1227 = vst.msk [vmem:[#allocation2 + $0x1a] sm:$0x1] %vm913, %v1225
    %1228 = vst.sshfl [vmem:[#allocation1] sm:$0xff pattern:$0x73625140] %v912
    %s1229 = scalar_lea.vmem [#allocation1], 1
    %v1230 = vld [vmem:[%s1229] ss:$4 sm:$0xff]
    %1231 = vrot.lane.b32.xlu0 %v1230, 64
    %v1232 = vpop.permute.xlu0 %1231
    %1234 = vst.msk [vmem:[#allocation2 + $0x1b] sm:$0x1] %vm913, %v1232
    %1235 = vst.sshfl [vmem:[#allocation1] sm:$0xff pattern:$0x73625140] %v912
    %s1236 = scalar_lea.vmem [#allocation1], 1
    %v1237 = vld [vmem:[%s1236] ss:$4 sm:$0xff]
    %v1238 = vrot.slane %v1237, 7
    %v1239 = vrot.slane %v1238, 2
    %1240 = vrot.lane.b32.xlu0 %v1239, 64
    %v1241 = vpop.permute.xlu0 %1240
    %1243 = vst.msk [vmem:[#allocation2 + $0x1a] sm:$0x1] %vm925, %v1241
    %1244 = vst.sshfl [vmem:[#allocation1] sm:$0xff pattern:$0x73625140] %v912
    %s1245 = scalar_lea.vmem [#allocation1], 1
    %v1246 = vld [vmem:[%s1245] ss:$4 sm:$0xff]
    %v1247 = vrot.slane %v1246, 7
    %v1248 = vrot.slane %v1247, 2
    %1250 = vst.msk [vmem:[#allocation2 + $0x1b] sm:$0x1] %vm925, %v1248
    %1251 = vst.sshfl [vmem:[#allocation1] sm:$0xff pattern:$0x73625140] %v912
    %s1252 = scalar_lea.vmem [#allocation1], 2
    %v1253 = vld [vmem:[%s1252] ss:$4 sm:$0xff]
    %1255 = vst.msk [vmem:[#allocation2 + $0x1c] sm:$0x1] %vm913, %v1253
    %1256 = vst.sshfl [vmem:[#allocation1] sm:$0xff pattern:$0x73625140] %v912
    %s1257 = scalar_lea.vmem [#allocation1], 2
    %v1258 = vld [vmem:[%s1257] ss:$4 sm:$0xff]
    %1259 = vrot.lane.b32.xlu0 %v1258, 64
    %v1260 = vpop.permute.xlu0 %1259
    %1262 = vst.msk [vmem:[#allocation2 + $0x1d] sm:$0x1] %vm913, %v1260
    %1263 = vst.sshfl [vmem:[#allocation1] sm:$0xff pattern:$0x73625140] %v912
    %s1264 = scalar_lea.vmem [#allocation1], 2
    %v1265 = vld [vmem:[%s1264] ss:$4 sm:$0xff]
    %v1266 = vrot.slane %v1265, 7
    %v1267 = vrot.slane %v1266, 2
    %1268 = vrot.lane.b32.xlu0 %v1267, 64
    %v1269 = vpop.permute.xlu0 %1268
    %1271 = vst.msk [vmem:[#allocation2 + $0x1c] sm:$0x1] %vm925, %v1269
    %1272 = vst.sshfl [vmem:[#allocation1] sm:$0xff pattern:$0x73625140] %v912
    %s1273 = scalar_lea.vmem [#allocation1], 2
    %v1274 = vld [vmem:[%s1273] ss:$4 sm:$0xff]
    %v1275 = vrot.slane %v1274, 7
    %v1276 = vrot.slane %v1275, 2
    %1278 = vst.msk [vmem:[#allocation2 + $0x1d] sm:$0x1] %vm925, %v1276
    %1279 = vst.sshfl [vmem:[#allocation1] sm:$0xff pattern:$0x73625140] %v912
    %s1280 = scalar_lea.vmem [#allocation1], 3
    %v1281 = vld [vmem:[%s1280] ss:$4 sm:$0xff]
    %1283 = vst.msk [vmem:[#allocation2 + $0x1e] sm:$0x1] %vm913, %v1281
    %1284 = vst.sshfl [vmem:[#allocation1] sm:$0xff pattern:$0x73625140] %v912
    %s1285 = scalar_lea.vmem [#allocation1], 3
    %v1286 = vld [vmem:[%s1285] ss:$4 sm:$0xff]
    %1287 = vrot.lane.b32.xlu0 %v1286, 64
    %v1288 = vpop.permute.xlu0 %1287
    %1290 = vst.msk [vmem:[#allocation2 + $0x1f] sm:$0x1] %vm913, %v1288
    %1291 = vst.sshfl [vmem:[#allocation1] sm:$0xff pattern:$0x73625140] %v912
    %s1292 = scalar_lea.vmem [#allocation1], 3
    %v1293 = vld [vmem:[%s1292] ss:$4 sm:$0xff]
    %v1294 = vrot.slane %v1293, 7
    %v1295 = vrot.slane %v1294, 2
    %1296 = vrot.lane.b32.xlu0 %v1295, 64
    %v1297 = vpop.permute.xlu0 %1296
    %1299 = vst.msk [vmem:[#allocation2 + $0x1e] sm:$0x1] %vm925, %v1297
    %1300 = vst.sshfl [vmem:[#allocation1] sm:$0xff pattern:$0x73625140] %v912
    %s1301 = scalar_lea.vmem [#allocation1], 3
    %v1302 = vld [vmem:[%s1301] ss:$4 sm:$0xff]
    %v1303 = vrot.slane %v1302, 7
    %v1304 = vrot.slane %v1303, 2
    %1306 = vst.msk [vmem:[#allocation2 + $0x1f] sm:$0x1] %vm925, %v1304
    %v1307 = vld [vmem:[#allocation2] sm:$0xff]
    %v1308 = vld [vmem:[#allocation2 + $0x8] sm:$0xff]
    %v1309 = vld [vmem:[#allocation2 + $0x10] sm:$0xff]
    %v1310 = vld [vmem:[#allocation2 + $0x18] sm:$0xff]
    %v1311 = vld [vmem:[#allocation8] sm:$0xff]
    %v1312 = vld [vmem:[#allocation8 + $0x8] sm:$0xff]
    %v1313 = vld [vmem:[#allocation8 + $0x10] sm:$0xff]
    %v1314 = vld [vmem:[#allocation8 + $0x18] sm:$0xff]
    %v1315 = vld [vmem:[#allocation8 + $0x20] sm:$0xff]
    %v1316 = vld [vmem:[#allocation8 + $0x28] sm:$0xff]
    %v1317 = vld [vmem:[#allocation8 + $0x30] sm:$0xff]
    %v1318 = vld [vmem:[#allocation8 + $0x38] sm:$0xff]
    %v1319 = vld [vmem:[#allocation8 + $0x40] sm:$0xff]
    %v1320 = vld [vmem:[#allocation8 + $0x48] sm:$0xff]
    %v1321 = vld [vmem:[#allocation8 + $0x50] sm:$0xff]
    %v1322 = vld [vmem:[#allocation8 + $0x58] sm:$0xff]
    %v1323 = vld [vmem:[#allocation8 + $0x60] sm:$0xff]
    %v1324 = vld [vmem:[#allocation8 + $0x68] sm:$0xff]
    %v1325 = vld [vmem:[#allocation8 + $0x70] sm:$0xff]
    %v1326 = vld [vmem:[#allocation8 + $0x78] sm:$0xff]
    %v1327 = vld [vmem:[%s9] sm:$0x1]
    %v1329 = vperm.slane %v1327, 0
    %1335 = vst [vmem:[#allocation1] ss:$4 sm:$0xff] %v1307
    %s1336 = scalar_lea.vmem [#allocation1], 32
    %1337 = vst [vmem:[%s1336] ss:$4 sm:$0xff] %v1308
    %v1338 = vld.sshfl [vmem:[#allocation1] sm:$0xff pattern:$0x73625140]
    %v1339 = vld.sshfl [vmem:[#allocation1 + $0x8] sm:$0xff pattern:$0x73625140]
    %v1340 = vld.sshfl [vmem:[#allocation1 + $0x10] sm:$0xff pattern:$0x73625140]
    %v1341 = vld.sshfl [vmem:[#allocation1 + $0x18] sm:$0xff pattern:$0x73625140]
    %v1342 = vld.sshfl [vmem:[#allocation1 + $0x20] sm:$0xff pattern:$0x73625140]
    %v1343 = vld.sshfl [vmem:[#allocation1 + $0x28] sm:$0xff pattern:$0x73625140]
    %v1344 = vld.sshfl [vmem:[#allocation1 + $0x30] sm:$0xff pattern:$0x73625140]
    %v1345 = vld.sshfl [vmem:[#allocation1 + $0x38] sm:$0xff pattern:$0x73625140]
    %1346 = vst [vmem:[#allocation1] ss:$4 sm:$0xff] %v1309
    %1347 = vst [vmem:[%s1336] ss:$4 sm:$0xff] %v1310
    %v1348 = vld.sshfl [vmem:[#allocation1] sm:$0xff pattern:$0x73625140]
    %v1349 = vld.sshfl [vmem:[#allocation1 + $0x8] sm:$0xff pattern:$0x73625140]
    %v1350 = vld.sshfl [vmem:[#allocation1 + $0x10] sm:$0xff pattern:$0x73625140]
    %v1351 = vld.sshfl [vmem:[#allocation1 + $0x18] sm:$0xff pattern:$0x73625140]
    %v1352 = vld.sshfl [vmem:[#allocation1 + $0x20] sm:$0xff pattern:$0x73625140]
    %v1353 = vld.sshfl [vmem:[#allocation1 + $0x28] sm:$0xff pattern:$0x73625140]
    %v1354 = vld.sshfl [vmem:[#allocation1 + $0x30] sm:$0xff pattern:$0x73625140]
    %v1355 = vld.sshfl [vmem:[#allocation1 + $0x38] sm:$0xff pattern:$0x73625140]
    %1372 = vmatpush.xpose.msra.mxu0 0.0
    %1373 = vmatpush.xpose.msra.mxu0 0.0
    %1374 = vmatpush.xpose.msra.mxu0 0.0
    %1375 = vmatpush.xpose.msra.mxu0 0.0
    %1376 = vmatpush.xpose.msra.mxu0 0.0
    %1377 = vmatpush.xpose.msra.mxu0 0.0
    %1378 = vmatpush.xpose.msra.mxu0 0.0
    %1379 = vmatpush.xpose.msra.mxu0 0.0
    %1380 = vmatpush.xpose.msra.mxu0 0.0
    %1381 = vmatpush.xpose.msra.mxu0 0.0
    %1382 = vmatpush.xpose.msra.mxu0 0.0
    %1383 = vmatpush.xpose.msra.mxu0 0.0
    %1384 = vmatpush.xpose.msra.mxu0 0.0
    %1385 = vmatpush.xpose.msra.mxu0 0.0
    %1386 = vmatpush.xpose.msra.mxu0 0.0
    %1387 = vmatpush.xpose.msra.mxu0 %v1311
    %1388 = vmatmul.f32.gmra.mxu0 %v1338
    %v1389 = vpop.f32.mrf.mxu0
    %v1390 = vadd.f32 %v1329, %v1389
    %1391 = vdwg.mxu0
    %1392 = vmatpush.xpose.msra.mxu0 0.0
    %1393 = vmatpush.xpose.msra.mxu0 0.0
    %1394 = vmatpush.xpose.msra.mxu0 0.0
    %1395 = vmatpush.xpose.msra.mxu0 0.0
    %1396 = vmatpush.xpose.msra.mxu0 0.0
    %1397 = vmatpush.xpose.msra.mxu0 0.0
    %1398 = vmatpush.xpose.msra.mxu0 0.0
    %1399 = vmatpush.xpose.msra.mxu0 0.0
    %1400 = vmatpush.xpose.msra.mxu0 0.0
    %1401 = vmatpush.xpose.msra.mxu0 0.0
    %1402 = vmatpush.xpose.msra.mxu0 0.0
    %1403 = vmatpush.xpose.msra.mxu0 0.0
    %1404 = vmatpush.xpose.msra.mxu0 0.0
    %1405 = vmatpush.xpose.msra.mxu0 0.0
    %1406 = vmatpush.xpose.msra.mxu0 0.0
    %1407 = vmatpush.xpose.msra.mxu0 %v1312
    %1408 = vmatmul.f32.gmra.mxu0 %v1339
    %v1409 = vpop.f32.mrf.mxu0
    %v1410 = vadd.f32 %v1390, %v1409
    %1411 = vdwg.mxu0
    %1412 = vmatpush.xpose.msra.mxu0 0.0
    %1413 = vmatpush.xpose.msra.mxu0 0.0
    %1414 = vmatpush.xpose.msra.mxu0 0.0
    %1415 = vmatpush.xpose.msra.mxu0 0.0
    %1416 = vmatpush.xpose.msra.mxu0 0.0
    %1417 = vmatpush.xpose.msra.mxu0 0.0
    %1418 = vmatpush.xpose.msra.mxu0 0.0
    %1419 = vmatpush.xpose.msra.mxu0 0.0
    %1420 = vmatpush.xpose.msra.mxu0 0.0
    %1421 = vmatpush.xpose.msra.mxu0 0.0
    %1422 = vmatpush.xpose.msra.mxu0 0.0
    %1423 = vmatpush.xpose.msra.mxu0 0.0
    %1424 = vmatpush.xpose.msra.mxu0 0.0
    %1425 = vmatpush.xpose.msra.mxu0 0.0
    %1426 = vmatpush.xpose.msra.mxu0 0.0
    %1427 = vmatpush.xpose.msra.mxu0 %v1313
    %1428 = vmatmul.f32.gmra.mxu0 %v1340
    %v1429 = vpop.f32.mrf.mxu0
    %v1430 = vadd.f32 %v1410, %v1429
    %1431 = vdwg.mxu0
    %1432 = vmatpush.xpose.msra.mxu0 0.0
    %1433 = vmatpush.xpose.msra.mxu0 0.0
    %1434 = vmatpush.xpose.msra.mxu0 0.0
    %1435 = vmatpush.xpose.msra.mxu0 0.0
    %1436 = vmatpush.xpose.msra.mxu0 0.0
    %1437 = vmatpush.xpose.msra.mxu0 0.0
    %1438 = vmatpush.xpose.msra.mxu0 0.0
    %1439 = vmatpush.xpose.msra.mxu0 0.0
    %1440 = vmatpush.xpose.msra.mxu0 0.0
    %1441 = vmatpush.xpose.msra.mxu0 0.0
    %1442 = vmatpush.xpose.msra.mxu0 0.0
    %1443 = vmatpush.xpose.msra.mxu0 0.0
    %1444 = vmatpush.xpose.msra.mxu0 0.0
    %1445 = vmatpush.xpose.msra.mxu0 0.0
    %1446 = vmatpush.xpose.msra.mxu0 0.0
    %1447 = vmatpush.xpose.msra.mxu0 %v1314
    %1448 = vmatmul.f32.gmra.mxu0 %v1341
    %v1449 = vpop.f32.mrf.mxu0
    %v1450 = vadd.f32 %v1430, %v1449
    %1451 = vdwg.mxu0
    %1452 = vmatpush.xpose.msra.mxu0 0.0
    %1453 = vmatpush.xpose.msra.mxu0 0.0
    %1454 = vmatpush.xpose.msra.mxu0 0.0
    %1455 = vmatpush.xpose.msra.mxu0 0.0
    %1456 = vmatpush.xpose.msra.mxu0 0.0
    %1457 = vmatpush.xpose.msra.mxu0 0.0
    %1458 = vmatpush.xpose.msra.mxu0 0.0
    %1459 = vmatpush.xpose.msra.mxu0 0.0
    %1460 = vmatpush.xpose.msra.mxu0 0.0
    %1461 = vmatpush.xpose.msra.mxu0 0.0
    %1462 = vmatpush.xpose.msra.mxu0 0.0
    %1463 = vmatpush.xpose.msra.mxu0 0.0
    %1464 = vmatpush.xpose.msra.mxu0 0.0
    %1465 = vmatpush.xpose.msra.mxu0 0.0
    %1466 = vmatpush.xpose.msra.mxu0 0.0
    %1467 = vmatpush.xpose.msra.mxu0 %v1315
    %1468 = vmatmul.f32.gmra.mxu0 %v1342
    %v1469 = vpop.f32.mrf.mxu0
    %v1470 = vadd.f32 %v1450, %v1469
    %1471 = vdwg.mxu0
    %1472 = vmatpush.xpose.msra.mxu0 0.0
    %1473 = vmatpush.xpose.msra.mxu0 0.0
    %1474 = vmatpush.xpose.msra.mxu0 0.0
    %1475 = vmatpush.xpose.msra.mxu0 0.0
    %1476 = vmatpush.xpose.msra.mxu0 0.0
    %1477 = vmatpush.xpose.msra.mxu0 0.0
    %1478 = vmatpush.xpose.msra.mxu0 0.0
    %1479 = vmatpush.xpose.msra.mxu0 0.0
    %1480 = vmatpush.xpose.msra.mxu0 0.0
    %1481 = vmatpush.xpose.msra.mxu0 0.0
    %1482 = vmatpush.xpose.msra.mxu0 0.0
    %1483 = vmatpush.xpose.msra.mxu0 0.0
    %1484 = vmatpush.xpose.msra.mxu0 0.0
    %1485 = vmatpush.xpose.msra.mxu0 0.0
    %1486 = vmatpush.xpose.msra.mxu0 0.0
    %1487 = vmatpush.xpose.msra.mxu0 %v1316
    %1488 = vmatmul.f32.gmra.mxu0 %v1343
    %v1489 = vpop.f32.mrf.mxu0
    %v1490 = vadd.f32 %v1470, %v1489
    %1491 = vdwg.mxu0
    %1492 = vmatpush.xpose.msra.mxu0 0.0
    %1493 = vmatpush.xpose.msra.mxu0 0.0
    %1494 = vmatpush.xpose.msra.mxu0 0.0
    %1495 = vmatpush.xpose.msra.mxu0 0.0
    %1496 = vmatpush.xpose.msra.mxu0 0.0
    %1497 = vmatpush.xpose.msra.mxu0 0.0
    %1498 = vmatpush.xpose.msra.mxu0 0.0
    %1499 = vmatpush.xpose.msra.mxu0 0.0
    %1500 = vmatpush.xpose.msra.mxu0 0.0
    %1501 = vmatpush.xpose.msra.mxu0 0.0
    %1502 = vmatpush.xpose.msra.mxu0 0.0
    %1503 = vmatpush.xpose.msra.mxu0 0.0
    %1504 = vmatpush.xpose.msra.mxu0 0.0
    %1505 = vmatpush.xpose.msra.mxu0 0.0
    %1506 = vmatpush.xpose.msra.mxu0 0.0
    %1507 = vmatpush.xpose.msra.mxu0 %v1317
    %1508 = vmatmul.f32.gmra.mxu0 %v1344
    %v1509 = vpop.f32.mrf.mxu0
    %v1510 = vadd.f32 %v1490, %v1509
    %1511 = vdwg.mxu0
    %1512 = vmatpush.xpose.msra.mxu0 0.0
    %1513 = vmatpush.xpose.msra.mxu0 0.0
    %1514 = vmatpush.xpose.msra.mxu0 0.0
    %1515 = vmatpush.xpose.msra.mxu0 0.0
    %1516 = vmatpush.xpose.msra.mxu0 0.0
    %1517 = vmatpush.xpose.msra.mxu0 0.0
    %1518 = vmatpush.xpose.msra.mxu0 0.0
    %1519 = vmatpush.xpose.msra.mxu0 0.0
    %1520 = vmatpush.xpose.msra.mxu0 0.0
    %1521 = vmatpush.xpose.msra.mxu0 0.0
    %1522 = vmatpush.xpose.msra.mxu0 0.0
    %1523 = vmatpush.xpose.msra.mxu0 0.0
    %1524 = vmatpush.xpose.msra.mxu0 0.0
    %1525 = vmatpush.xpose.msra.mxu0 0.0
    %1526 = vmatpush.xpose.msra.mxu0 0.0
    %1527 = vmatpush.xpose.msra.mxu0 %v1318
    %1528 = vmatmul.f32.gmra.mxu0 %v1345
    %v1529 = vpop.f32.mrf.mxu0
    %v1530 = vadd.f32 %v1510, %v1529
    %1531 = vdwg.mxu0
    %1532 = vmatpush.xpose.msra.mxu0 0.0
    %1533 = vmatpush.xpose.msra.mxu0 0.0
    %1534 = vmatpush.xpose.msra.mxu0 0.0
    %1535 = vmatpush.xpose.msra.mxu0 0.0
    %1536 = vmatpush.xpose.msra.mxu0 0.0
    %1537 = vmatpush.xpose.msra.mxu0 0.0
    %1538 = vmatpush.xpose.msra.mxu0 0.0
    %1539 = vmatpush.xpose.msra.mxu0 0.0
    %1540 = vmatpush.xpose.msra.mxu0 0.0
    %1541 = vmatpush.xpose.msra.mxu0 0.0
    %1542 = vmatpush.xpose.msra.mxu0 0.0
    %1543 = vmatpush.xpose.msra.mxu0 0.0
    %1544 = vmatpush.xpose.msra.mxu0 0.0
    %1545 = vmatpush.xpose.msra.mxu0 0.0
    %1546 = vmatpush.xpose.msra.mxu0 0.0
    %1547 = vmatpush.xpose.msra.mxu0 %v1319
    %1548 = vmatmul.f32.gmra.mxu0 %v1348
    %v1549 = vpop.f32.mrf.mxu0
    %v1550 = vadd.f32 %v1530, %v1549
    %1551 = vdwg.mxu0
    %1552 = vmatpush.xpose.msra.mxu0 0.0
    %1553 = vmatpush.xpose.msra.mxu0 0.0
    %1554 = vmatpush.xpose.msra.mxu0 0.0
    %1555 = vmatpush.xpose.msra.mxu0 0.0
    %1556 = vmatpush.xpose.msra.mxu0 0.0
    %1557 = vmatpush.xpose.msra.mxu0 0.0
    %1558 = vmatpush.xpose.msra.mxu0 0.0
    %1559 = vmatpush.xpose.msra.mxu0 0.0
    %1560 = vmatpush.xpose.msra.mxu0 0.0
    %1561 = vmatpush.xpose.msra.mxu0 0.0
    %1562 = vmatpush.xpose.msra.mxu0 0.0
    %1563 = vmatpush.xpose.msra.mxu0 0.0
    %1564 = vmatpush.xpose.msra.mxu0 0.0
    %1565 = vmatpush.xpose.msra.mxu0 0.0
    %1566 = vmatpush.xpose.msra.mxu0 0.0
    %1567 = vmatpush.xpose.msra.mxu0 %v1320
    %1568 = vmatmul.f32.gmra.mxu0 %v1349
    %v1569 = vpop.f32.mrf.mxu0
    %v1570 = vadd.f32 %v1550, %v1569
    %1571 = vdwg.mxu0
    %1572 = vmatpush.xpose.msra.mxu0 0.0
    %1573 = vmatpush.xpose.msra.mxu0 0.0
    %1574 = vmatpush.xpose.msra.mxu0 0.0
    %1575 = vmatpush.xpose.msra.mxu0 0.0
    %1576 = vmatpush.xpose.msra.mxu0 0.0
    %1577 = vmatpush.xpose.msra.mxu0 0.0
    %1578 = vmatpush.xpose.msra.mxu0 0.0
    %1579 = vmatpush.xpose.msra.mxu0 0.0
    %1580 = vmatpush.xpose.msra.mxu0 0.0
    %1581 = vmatpush.xpose.msra.mxu0 0.0
    %1582 = vmatpush.xpose.msra.mxu0 0.0
    %1583 = vmatpush.xpose.msra.mxu0 0.0
    %1584 = vmatpush.xpose.msra.mxu0 0.0
    %1585 = vmatpush.xpose.msra.mxu0 0.0
    %1586 = vmatpush.xpose.msra.mxu0 0.0
    %1587 = vmatpush.xpose.msra.mxu0 %v1321
    %1588 = vmatmul.f32.gmra.mxu0 %v1350
    %v1589 = vpop.f32.mrf.mxu0
    %v1590 = vadd.f32 %v1570, %v1589
    %1591 = vdwg.mxu0
    %1592 = vmatpush.xpose.msra.mxu0 0.0
    %1593 = vmatpush.xpose.msra.mxu0 0.0
    %1594 = vmatpush.xpose.msra.mxu0 0.0
    %1595 = vmatpush.xpose.msra.mxu0 0.0
    %1596 = vmatpush.xpose.msra.mxu0 0.0
    %1597 = vmatpush.xpose.msra.mxu0 0.0
    %1598 = vmatpush.xpose.msra.mxu0 0.0
    %1599 = vmatpush.xpose.msra.mxu0 0.0
    %1600 = vmatpush.xpose.msra.mxu0 0.0
    %1601 = vmatpush.xpose.msra.mxu0 0.0
    %1602 = vmatpush.xpose.msra.mxu0 0.0
    %1603 = vmatpush.xpose.msra.mxu0 0.0
    %1604 = vmatpush.xpose.msra.mxu0 0.0
    %1605 = vmatpush.xpose.msra.mxu0 0.0
    %1606 = vmatpush.xpose.msra.mxu0 0.0
    %1607 = vmatpush.xpose.msra.mxu0 %v1322
    %1608 = vmatmul.f32.gmra.mxu0 %v1351
    %v1609 = vpop.f32.mrf.mxu0
    %v1610 = vadd.f32 %v1590, %v1609
    %1611 = vdwg.mxu0
    %1612 = vmatpush.xpose.msra.mxu0 0.0
    %1613 = vmatpush.xpose.msra.mxu0 0.0
    %1614 = vmatpush.xpose.msra.mxu0 0.0
    %1615 = vmatpush.xpose.msra.mxu0 0.0
    %1616 = vmatpush.xpose.msra.mxu0 0.0
    %1617 = vmatpush.xpose.msra.mxu0 0.0
    %1618 = vmatpush.xpose.msra.mxu0 0.0
    %1619 = vmatpush.xpose.msra.mxu0 0.0
    %1620 = vmatpush.xpose.msra.mxu0 0.0
    %1621 = vmatpush.xpose.msra.mxu0 0.0
    %1622 = vmatpush.xpose.msra.mxu0 0.0
    %1623 = vmatpush.xpose.msra.mxu0 0.0
    %1624 = vmatpush.xpose.msra.mxu0 0.0
    %1625 = vmatpush.xpose.msra.mxu0 0.0
    %1626 = vmatpush.xpose.msra.mxu0 0.0
    %1627 = vmatpush.xpose.msra.mxu0 %v1323
    %1628 = vmatmul.f32.gmra.mxu0 %v1352
    %v1629 = vpop.f32.mrf.mxu0
    %v1630 = vadd.f32 %v1610, %v1629
    %1631 = vdwg.mxu0
    %1632 = vmatpush.xpose.msra.mxu0 0.0
    %1633 = vmatpush.xpose.msra.mxu0 0.0
    %1634 = vmatpush.xpose.msra.mxu0 0.0
    %1635 = vmatpush.xpose.msra.mxu0 0.0
    %1636 = vmatpush.xpose.msra.mxu0 0.0
    %1637 = vmatpush.xpose.msra.mxu0 0.0
    %1638 = vmatpush.xpose.msra.mxu0 0.0
    %1639 = vmatpush.xpose.msra.mxu0 0.0
    %1640 = vmatpush.xpose.msra.mxu0 0.0
    %1641 = vmatpush.xpose.msra.mxu0 0.0
    %1642 = vmatpush.xpose.msra.mxu0 0.0
    %1643 = vmatpush.xpose.msra.mxu0 0.0
    %1644 = vmatpush.xpose.msra.mxu0 0.0
    %1645 = vmatpush.xpose.msra.mxu0 0.0
    %1646 = vmatpush.xpose.msra.mxu0 0.0
    %1647 = vmatpush.xpose.msra.mxu0 %v1324
    %1648 = vmatmul.f32.gmra.mxu0 %v1353
    %v1649 = vpop.f32.mrf.mxu0
    %v1650 = vadd.f32 %v1630, %v1649
    %1651 = vdwg.mxu0
    %1652 = vmatpush.xpose.msra.mxu0 0.0
    %1653 = vmatpush.xpose.msra.mxu0 0.0
    %1654 = vmatpush.xpose.msra.mxu0 0.0
    %1655 = vmatpush.xpose.msra.mxu0 0.0
    %1656 = vmatpush.xpose.msra.mxu0 0.0
    %1657 = vmatpush.xpose.msra.mxu0 0.0
    %1658 = vmatpush.xpose.msra.mxu0 0.0
    %1659 = vmatpush.xpose.msra.mxu0 0.0
    %1660 = vmatpush.xpose.msra.mxu0 0.0
    %1661 = vmatpush.xpose.msra.mxu0 0.0
    %1662 = vmatpush.xpose.msra.mxu0 0.0
    %1663 = vmatpush.xpose.msra.mxu0 0.0
    %1664 = vmatpush.xpose.msra.mxu0 0.0
    %1665 = vmatpush.xpose.msra.mxu0 0.0
    %1666 = vmatpush.xpose.msra.mxu0 0.0
    %1667 = vmatpush.xpose.msra.mxu0 %v1325
    %1668 = vmatmul.f32.gmra.mxu0 %v1354
    %v1669 = vpop.f32.mrf.mxu0
    %v1670 = vadd.f32 %v1650, %v1669
    %1671 = vdwg.mxu0
    %1672 = vmatpush.xpose.msra.mxu0 0.0
    %1673 = vmatpush.xpose.msra.mxu0 0.0
    %1674 = vmatpush.xpose.msra.mxu0 0.0
    %1675 = vmatpush.xpose.msra.mxu0 0.0
    %1676 = vmatpush.xpose.msra.mxu0 0.0
    %1677 = vmatpush.xpose.msra.mxu0 0.0
    %1678 = vmatpush.xpose.msra.mxu0 0.0
    %1679 = vmatpush.xpose.msra.mxu0 0.0
    %1680 = vmatpush.xpose.msra.mxu0 0.0
    %1681 = vmatpush.xpose.msra.mxu0 0.0
    %1682 = vmatpush.xpose.msra.mxu0 0.0
    %1683 = vmatpush.xpose.msra.mxu0 0.0
    %1684 = vmatpush.xpose.msra.mxu0 0.0
    %1685 = vmatpush.xpose.msra.mxu0 0.0
    %1686 = vmatpush.xpose.msra.mxu0 0.0
    %1687 = vmatpush.xpose.msra.mxu0 %v1326
    %1688 = vmatmul.f32.gmra.mxu0 %v1355
    %v1689 = vpop.f32.mrf.mxu0
    %v1690 = vadd.f32 %v1670, %v1689
    %1691 = vdwg.mxu0
    %vm1692 = vcmask 25600
    %v1693 = vsel %vm1692, %v1690, 0.0
    %1694 = vadd.xlane.f32.xlu0 %v1693
    %v1695 = vpop.xlane.xlu0 %1694
    %v1696 = vrot.slane %v1695, 4
    %v1697 = vadd.f32 %v1695, %v1696
    %v1698 = vrot.slane %v1697, 2
    %v1699 = vadd.f32 %v1697, %v1698
    %v1700 = vrot.slane %v1699, 1
    %v1701 = vadd.f32 %v1699, %v1700
    %s1702 = vtos %v1701
    %v1703 = vrcp.pop 8.0
    %v1704 = vmul.f32 8.0, %v1703
    %v1705 = vsub.f32 1.0, %v1704
    %v1706 = vmul.f32 %v1703, %v1705
    %v1707 = vadd.f32 %v1703, %v1706
    %vm1708 = vweird.f32 %v1703
    %v1709 = vsel %vm1708, %v1703, %v1707
    %s1710 = vtos %v1709
    %s1711 = smul.f32 %s1702, %s1710
    %v1712 = vstv %s1711
    %v1713 = vsub.f32 %v1690, %v1712
    %1715 = vset.pattern.permute.xlu0 4
    %1716 = vperm.xlu0 %1715, %v1690
    %v1717 = vpop.permute.xlu0 %1716
    %v1719 = vadd.f32 %v1717, %v1713
    %1720 = vst.msk [vmem:[#allocation9] sm:$0x3] %vm1692, %v1719
    // Predicated region
    $region54: #{intrinsic_model_forward.1} parent=1 // pred_check
      _
    $region55: #{intrinsic_model_forward.1} parent=1 // pred_check_branch
      %1722 = sbr.rel (0) target = $region57
    $region56: #{intrinsic_model_forward.1} parent=1 // pred_region
      %1724 = vsyncadd [#allocation5], 0
      %s1726 = sshll.u32 [#allocation9], 4
      %s1727 = int_to_ptr.vmem [resolvable:$true] %s1726
      %s1728 = sshll.u32 %s10, 4
      %s1729 = int_to_ptr.hbm [resolvable:$true] %s1728
      %1731 = dma.vmem_to_hbm [thread:$0]  %s1727, 32, %s1729, [#allocation5]
    $region57: #{intrinsic_model_forward.1} parent=1 // pred_fallthru
      _
    // Predicated region
    $region58: #{intrinsic_model_forward.1} parent=1 // pred_check
      _
    $region59: #{intrinsic_model_forward.1} parent=1 // pred_check_branch
      %1733 = sbr.rel (0) target = $region61
    $region60: #{intrinsic_model_forward.1} parent=1 // pred_region
      %1735 = dma.done [#allocation5], 32
    $region61: #{intrinsic_model_forward.1} parent=1 // pred_fallthru
      _
    %1736 = vsyncpa [#allocation4], 1
    %1737 = vsyncpa [#allocation7], 1
    %1738 = vsyncpa [#allocation5], 1

</llo_original>
